<compile_context>
chip_gen: v6e
topology: v6e:2x2x1
jax: 0.10.0
libtpu: 0.0.40
codegen_flags: <defaults>
</compile_context>

<pallas_src>
import math
import functools

import numpy as np
import jax
import jax.numpy as jnp
from jax.experimental import pallas as pl
from jax.experimental.pallas import tpu as pltpu

GN_GROUPS = 32
GN_EPS = 1e-5
# Row-tile size: small here so the multi-tile GroupNorm-stats path is actually
# exercised at demo shapes; for production maps pick th so the bf16 window
# (th+2)*(W+2)*C*2B stays in the few-MB range (fits v7x 64 MiB VMEM w/ 2x buf).
TILE_ROWS = 8
VMEM_LIMIT = 32 * 1024 * 1024      # safe on v5e / v6e / v7x


# ---------------------------------------------------------------------------
# In-kernel helpers / kernels
# ---------------------------------------------------------------------------
def _conv3x3_acc(xw_ref, w_ref):
    """3x3 'same' conv of one halo'd row window as 9 shifted MXU dots.

    xw_ref: (B, 1, th+2, W+2, C) bf16  (B=1 for tower kernels, B=N for preds)
    w_ref:  (3, 3, C, Cout)      bf16
    returns (B*th*W, Cout) f32 accumulator.
    """
    B = xw_ref.shape[0]
    th = xw_ref.shape[2] - 2
    W = xw_ref.shape[3] - 2
    C = xw_ref.shape[4]
    Cout = w_ref.shape[3]
    M = B * th * W

    x = xw_ref[...].reshape(B, th + 2, W + 2, C)   # drop the unit window dim
    w = w_ref[...]

    acc = jnp.zeros((M, Cout), jnp.float32)
    for dh in range(3):
        for dw in range(3):
            xs = x[:, dh:dh + th, dw:dw + W, :].reshape(M, C)
            acc = acc + jnp.dot(xs, w[dh, dw],
                                preferred_element_type=jnp.float32)
    return acc


def tower_conv_stats_kernel(xw_ref, w_ref, stats_ref):
    # grid (N, HT); stats block (1, 2, C) is resident across the HT axis.
    y = _conv3x3_acc(xw_ref, w_ref)                          # (th*W, C) f32
    ssum = jnp.sum(y, axis=0, keepdims=True)                 # (1, C)
    ssq = jnp.sum(y * y, axis=0, keepdims=True)              # (1, C)

    @pl.when(pl.program_id(1) == 0)
    def _():
        stats_ref[...] = jnp.zeros_like(stats_ref)

    stats_ref[...] += jnp.concatenate([ssum, ssq], axis=0)[None]


def tower_conv_gn_act_kernel(cnt, xw_ref, w_ref, stats_ref, gamma_ref, beta_ref,
                             grp_ref, grpT_ref, alpha_ref, o_ref):
    # cnt = H*W*(C//G): GroupNorm reduction size (static per level).
    y = _conv3x3_acc(xw_ref, w_ref)                          # (th*W, C) f32

    stats = stats_ref[0]                                     # (2, C)
    ssum = stats[0:1, :]
    ssq = stats[1:2, :]
    gsum = jnp.dot(ssum, grp_ref[...], preferred_element_type=jnp.float32)   # (1,G)
    gsq = jnp.dot(ssq, grp_ref[...], preferred_element_type=jnp.float32)
    gmean = gsum / cnt
    gvar = gsq / cnt - gmean * gmean
    ginv = jax.lax.rsqrt(gvar + GN_EPS)
    cmean = jnp.dot(gmean, grpT_ref[...], preferred_element_type=jnp.float32)  # (1,C)
    cinv = jnp.dot(ginv, grpT_ref[...], preferred_element_type=jnp.float32)

    yn = (y - cmean) * cinv
    yn = yn * gamma_ref[...] + beta_ref[...]
    a = alpha_ref[0, 0]                                      # PReLU slope (SMEM)
    yn = jnp.where(yn >= 0.0, yn, a * yn)
    o_ref[0] = yn.astype(o_ref.dtype)


def pred_conv_kernel(apply_exp, xw_ref, w_ref, b_ref, scale_ref, o_ref):
    # grid (HT,); batch folded into the GEMM M dimension.
    y = _conv3x3_acc(xw_ref, w_ref)                          # (N*th*W, Cout) f32
    y = y + b_ref[...]
    if apply_exp:
        y = jnp.exp(y * scale_ref[0, 0])
    o_ref[...] = y.reshape(o_ref.shape).astype(o_ref.dtype)


# ---------------------------------------------------------------------------
# JAX glue: padding / halo windows + pallas_call wrappers
# ---------------------------------------------------------------------------
def _pick_tile_rows(H, max_rows=TILE_ROWS):
    th = min(H, max_rows)
    while H % th:
        th -= 1
    return th


def _halo_row_windows(x_nhwc, th):
    """(N,H,W,C) -> (N, HT, th+2, W+2, C): zero-padded overlapping row windows."""
    xp = jnp.pad(x_nhwc, ((0, 0), (1, 1), (1, 1), (0, 0)))
    H = x_nhwc.shape[1]
    HT = H // th
    if HT == 1:
        return xp[:, None]
    return jnp.stack([xp[:, i * th:i * th + th + 2] for i in range(HT)], axis=1)


def _group_mats(C, G=GN_GROUPS):
    cpg = C // G
    A = (np.arange(C)[:, None] // cpg == np.arange(G)[None, :]).astype(np.float32)
    return jnp.asarray(A), jnp.asarray(A.T)                  # (C, G), (G, C)


def _compiler_params(dims):
    return pltpu.CompilerParams(dimension_semantics=dims,
                                vmem_limit_bytes=VMEM_LIMIT)


def tower_layer(x, w, gamma, beta, alpha, *, tile_rows=TILE_ROWS):
    """conv3x3(no bias) + GroupNorm(32) + PReLU; NHWC bf16 in -> bf16 out."""
    N, H, W, C = x.shape
    th = _pick_tile_rows(H, tile_rows)
    HT = H // th
    xw = _halo_row_windows(x, th)                            # (N,HT,th+2,W+2,C)
    wb = w.astype(jnp.bfloat16)
    A, At = _group_mats(C)

    xw_spec = pl.BlockSpec((1, 1, th + 2, W + 2, C), lambda n, t: (n, t, 0, 0, 0))
    w_spec = pl.BlockSpec((3, 3, C, C), lambda n, t: (0, 0, 0, 0))

    # pass A: conv + per-channel sum / sumsq reduced over row tiles
    stats = pl.pallas_call(
        tower_conv_stats_kernel,
        out_shape=jax.ShapeDtypeStruct((N, 2, C), jnp.float32),
        grid=(N, HT),
        in_specs=[xw_spec, w_spec],
        out_specs=pl.BlockSpec((1, 2, C), lambda n, t: (n, 0, 0)),
        compiler_params=_compiler_params(("parallel", "arbitrary")),
    )(xw, wb)

    # pass B: conv recompute + normalize + affine + PReLU
    out = pl.pallas_call(
        functools.partial(tower_conv_gn_act_kernel,
                          float(H * W * (C // GN_GROUPS))),
        out_shape=jax.ShapeDtypeStruct((N, H * W, C), jnp.bfloat16),
        grid=(N, HT),
        in_specs=[
            xw_spec, w_spec,
            pl.BlockSpec((1, 2, C), lambda n, t: (n, 0, 0)),
            pl.BlockSpec((1, C), lambda n, t: (0, 0)),
            pl.BlockSpec((1, C), lambda n, t: (0, 0)),
            pl.BlockSpec((C, GN_GROUPS), lambda n, t: (0, 0)),
            pl.BlockSpec((GN_GROUPS, C), lambda n, t: (0, 0)),
            pl.BlockSpec(memory_space=pltpu.MemorySpace.SMEM),
        ],
        out_specs=pl.BlockSpec((1, th * W, C), lambda n, t: (n, t, 0)),
        compiler_params=_compiler_params(("parallel", "parallel")),
    )(xw, wb, stats,
      gamma.reshape(1, C).astype(jnp.float32),
      beta.reshape(1, C).astype(jnp.float32),
      A, At,
      jnp.asarray(alpha, jnp.float32).reshape(1, 1))
    return out.reshape(N, H, W, C)


def pred_layer(xw, w, b, scale, apply_exp, N, H, W, th):
    """conv3x3 + bias (+ scale & exp).  xw: halo'd row windows of tower output."""
    C = xw.shape[-1]
    Cout = w.shape[-1]
    HT = H // th
    out = pl.pallas_call(
        functools.partial(pred_conv_kernel, apply_exp),
        out_shape=jax.ShapeDtypeStruct((N, H * W, Cout), jnp.float32),
        grid=(HT,),
        in_specs=[
            pl.BlockSpec((N, 1, th + 2, W + 2, C), lambda t: (0, t, 0, 0, 0)),
            pl.BlockSpec((3, 3, C, Cout), lambda t: (0, 0, 0, 0)),
            pl.BlockSpec((1, Cout), lambda t: (0, 0)),
            pl.BlockSpec(memory_space=pltpu.MemorySpace.SMEM),
        ],
        out_specs=pl.BlockSpec((N, th * W, Cout), lambda t: (0, t, 0)),
        compiler_params=_compiler_params(("parallel",)),
    )(xw, w.astype(jnp.bfloat16),
      b.reshape(1, Cout).astype(jnp.float32),
      jnp.asarray(scale, jnp.float32).reshape(1, 1))
    return out.reshape(N, H, W, Cout)


# ---------------------------------------------------------------------------
# FCOSHead parameters + forward (mirrors the PyTorch module)
# ---------------------------------------------------------------------------
def init_fcos_head_params(key, in_channel, n_class, n_conv, prior):
    assert in_channel % GN_GROUPS == 0
    ncls = n_class - 1
    C = in_channel
    keys = jax.random.split(key, 2 * n_conv + 3)
    kidx = 0

    def conv_w(k, cout):
        return 0.01 * jax.random.normal(k, (3, 3, C, cout), jnp.float32)

    params = {"cls_tower": [], "bbox_tower": []}
    for _ in range(n_conv):
        params["cls_tower"].append(dict(
            w=conv_w(keys[kidx], C),
            gamma=jnp.ones((C,), jnp.float32),
            beta=jnp.zeros((C,), jnp.float32),
            alpha=jnp.float32(0.25),
        ))
        kidx += 1
    for _ in range(n_conv):
        params["bbox_tower"].append(dict(
            w=conv_w(keys[kidx], C),
            gamma=jnp.ones((C,), jnp.float32),
            beta=jnp.zeros((C,), jnp.float32),
            alpha=jnp.float32(0.25),
        ))
        kidx += 1

    prior_bias = -math.log((1 - prior) / prior)
    params["cls_pred_w"] = conv_w(keys[kidx], ncls); kidx += 1
    params["cls_pred_b"] = jnp.full((ncls,), prior_bias, jnp.float32)
    params["bbox_pred_w"] = conv_w(keys[kidx], 4); kidx += 1
    params["bbox_pred_b"] = jnp.zeros((4,), jnp.float32)
    params["center_pred_w"] = conv_w(keys[kidx], 1); kidx += 1
    params["center_pred_b"] = jnp.zeros((1,), jnp.float32)
    params["scales"] = [jnp.float32(1.0) for _ in range(5)]
    return params


def fcos_head_forward(params, inputs_nchw, *, tile_rows=TILE_ROWS):
    """inputs_nchw: list of 5 NCHW feature maps.  Returns (logits, bboxes,
    centers), each a list of NCHW arrays, matching the PyTorch module."""
    ncls = params["cls_pred_w"].shape[-1]
    # fused cls + centerness head: both read the same cls-tower output
    w_cc = jnp.concatenate([params["cls_pred_w"], params["center_pred_w"]], axis=-1)
    b_cc = jnp.concatenate([params["cls_pred_b"], params["center_pred_b"]], axis=0)

    logits, bboxes, centers = [], [], []
    for feat_nchw, scale in zip(inputs_nchw, params["scales"]):
        feat = jnp.transpose(feat_nchw, (0, 2, 3, 1)).astype(jnp.bfloat16)  # NHWC bf16
        N, H, W, C = feat.shape
        th = _pick_tile_rows(H, tile_rows)

        cls_out = feat
        for lyr in params["cls_tower"]:
            cls_out = tower_layer(cls_out, lyr["w"], lyr["gamma"], lyr["beta"],
                                  lyr["alpha"], tile_rows=tile_rows)
        bbox_out = feat
        for lyr in params["bbox_tower"]:
            bbox_out = tower_layer(bbox_out, lyr["w"], lyr["gamma"], lyr["beta"],
                                   lyr["alpha"], tile_rows=tile_rows)

        cls_w = _halo_row_windows(cls_out, th)
        bbox_w = _halo_row_windows(bbox_out, th)

        cc = pred_layer(cls_w, w_cc, b_cc, 1.0, False, N, H, W, th)   # (N,H,W,ncls+1)
        bbox = pred_layer(bbox_w, params["bbox_pred_w"], params["bbox_pred_b"],
                          scale, True, N, H, W, th)

        logits.append(jnp.transpose(cc[..., :ncls], (0, 3, 1, 2)))
        centers.append(jnp.transpose(cc[..., ncls:], (0, 3, 1, 2)))
        bboxes.append(jnp.transpose(bbox, (0, 3, 1, 2)))
    return logits, bboxes, centers


# ---------------------------------------------------------------------------
# Pure-JAX f32 reference (for correctness check)
# ---------------------------------------------------------------------------
def _conv3x3_ref(x, w, b=None):
    y = jax.lax.conv_general_dilated(
        x, w, window_strides=(1, 1), padding="SAME",
        dimension_numbers=("NHWC", "HWIO", "NHWC"))
    if b is not None:
        y = y + b
    return y


def _gn_ref(x, gamma, beta):
    N, H, W, C = x.shape
    G = GN_GROUPS
    xg = x.reshape(N, H, W, G, C // G)
    mean = xg.mean(axis=(1, 2, 4), keepdims=True)
    var = ((xg - mean) ** 2).mean(axis=(1, 2, 4), keepdims=True)
    xn = (xg - mean) / jnp.sqrt(var + GN_EPS)
    return xn.reshape(N, H, W, C) * gamma + beta


def fcos_head_forward_ref(params, inputs_nchw):
    logits, bboxes, centers = [], [], []
    for feat_nchw, scale in zip(inputs_nchw, params["scales"]):
        feat = jnp.transpose(feat_nchw, (0, 2, 3, 1)).astype(jnp.float32)

        def tower(x, layers):
            for lyr in layers:
                x = _conv3x3_ref(x, lyr["w"])
                x = _gn_ref(x, lyr["gamma"], lyr["beta"])
                x = jnp.where(x >= 0, x, lyr["alpha"] * x)
            return x

        cls_out = tower(feat, params["cls_tower"])
        bbox_out = tower(feat, params["bbox_tower"])
        logit = _conv3x3_ref(cls_out, params["cls_pred_w"], params["cls_pred_b"])
        center = _conv3x3_ref(cls_out, params["center_pred_w"], params["center_pred_b"])
        bbox = jnp.exp(_conv3x3_ref(bbox_out, params["bbox_pred_w"],
                                    params["bbox_pred_b"]) * scale)

        logits.append(jnp.transpose(logit, (0, 3, 1, 2)))
        centers.append(jnp.transpose(center, (0, 3, 1, 2)))
        bboxes.append(jnp.transpose(bbox, (0, 3, 1, 2)))
    return logits, bboxes, centers


# ---------------------------------------------------------------------------
if __name__ == "__main__":
    in_channel, n_class, n_conv, prior = 64, 5, 2, 0.01
    batch = 2
    spatial = [16, 8, 8, 4, 4]   # 5 FPN levels

    key = jax.random.PRNGKey(0)
    pkey, xkey = jax.random.split(key)
    params = init_fcos_head_params(pkey, in_channel, n_class, n_conv, prior)

    xkeys = jax.random.split(xkey, len(spatial))
    inputs = [jax.random.normal(k, (batch, in_channel, s, s), jnp.float32)
              for k, s in zip(xkeys, spatial)]

    logits, bboxes, centers = fcos_head_forward(params, inputs)
    jax.block_until_ready((logits, bboxes, centers))

    # correctness check against a pure-JAX/XLA f32 reference
    # (kernel path uses bf16 MXU operands -> compare at bf16-level tolerance)
    ref_logits, ref_bboxes, ref_centers = fcos_head_forward_ref(params, inputs)
    for got, ref in zip(logits + bboxes + centers,
                        ref_logits + ref_bboxes + ref_centers):
        np.testing.assert_allclose(np.asarray(got), np.asarray(ref),
                                   rtol=3e-2, atol=3e-2)

    print("KERNEL_OK")
</pallas_src>

<mosaic_0001>
module attributes {stable_mosaic.version = 11 : i64} {
  func.func @tower_conv_stats_kernel(%arg0: i32, %arg1: i32, %arg2: memref<1x1x10x18x64xbf16, #tpu.memory_space<vmem>>, %arg3: memref<3x3x64x64xbf16, #tpu.memory_space<vmem>>, %arg4: memref<1x2x64xf32, #tpu.memory_space<vmem>>) attributes {dimension_semantics = [#tpu.dimension_semantics<parallel>, #tpu.dimension_semantics<arbitrary>], iteration_bounds = array<i64: 2, 2>, scalar_prefetch = 0 : i64, scratch_operands = 0 : i64, tpu.core_type = #tpu.core_type<tc>, window_params = [{transform_indices = @transform_0, window_bounds = array<i64: 1, 1, 10, 18, 64>}, {pipeline_mode = #tpu.pipeline_mode<synchronous>, transform_indices = @transform_1, window_bounds = array<i64: 3, 3, 64, 64>}, {transform_indices = @transform_2, window_bounds = array<i64: 1, 2, 64>}]} {
    %c0 = arith.constant 0 : index
    %c0_0 = arith.constant 0 : index
    %c0_1 = arith.constant 0 : index
    %c0_2 = arith.constant 0 : index
    %c0_3 = arith.constant 0 : index
    %0 = vector.load %arg2[%c0, %c0_0, %c0_1, %c0_2, %c0_3] : memref<1x1x10x18x64xbf16, #tpu.memory_space<vmem>>, vector<1x1x10x18x64xbf16>
    %1 = vector.shape_cast %0 : vector<1x1x10x18x64xbf16> to vector<1x10x18x64xbf16>
    %c0_4 = arith.constant 0 : index
    %c0_5 = arith.constant 0 : index
    %c0_6 = arith.constant 0 : index
    %c0_7 = arith.constant 0 : index
    %2 = vector.load %arg3[%c0_4, %c0_5, %c0_6, %c0_7] : memref<3x3x64x64xbf16, #tpu.memory_space<vmem>>, vector<3x3x64x64xbf16>
    %cst = arith.constant 0.000000e+00 : f32
    %3 = vector.broadcast %cst : f32 to vector<128x64xf32>
    %4 = vector.extract_strided_slice %1 {offsets = [0, 0, 0, 0], sizes = [1, 8, 16, 64], strides = [1, 1, 1, 1]} : vector<1x10x18x64xbf16> to vector<1x8x16x64xbf16>
    %5 = vector.shape_cast %4 : vector<1x8x16x64xbf16> to vector<128x64xbf16>
    %6 = vector.extract_strided_slice %2 {offsets = [0, 0, 0, 0], sizes = [1, 1, 64, 64], strides = [1, 1, 1, 1]} : vector<3x3x64x64xbf16> to vector<1x1x64x64xbf16>
    %7 = vector.shape_cast %6 : vector<1x1x64x64xbf16> to vector<64x64xbf16>
    %cst_8 = arith.constant dense<0.000000e+00> : vector<128x64xf32>
    %8 = tpu.matmul %5, %7, %cst_8 {dimension_numbers = #tpu.dot_dimension_numbers<[1], [0], [0], [1], [0, 0, 1, 1], [], []>} : vector<128x64xbf16>, vector<64x64xbf16>, vector<128x64xf32> -> vector<128x64xf32>
    %9 = arith.addf %3, %8 : vector<128x64xf32>
    %10 = vector.extract_strided_slice %1 {offsets = [0, 0, 1, 0], sizes = [1, 8, 16, 64], strides = [1, 1, 1, 1]} : vector<1x10x18x64xbf16> to vector<1x8x16x64xbf16>
    %11 = vector.shape_cast %10 : vector<1x8x16x64xbf16> to vector<128x64xbf16>
    %12 = vector.extract_strided_slice %2 {offsets = [0, 1, 0, 0], sizes = [1, 1, 64, 64], strides = [1, 1, 1, 1]} : vector<3x3x64x64xbf16> to vector<1x1x64x64xbf16>
    %13 = vector.shape_cast %12 : vector<1x1x64x64xbf16> to vector<64x64xbf16>
    %cst_9 = arith.constant dense<0.000000e+00> : vector<128x64xf32>
    %14 = tpu.matmul %11, %13, %cst_9 {dimension_numbers = #tpu.dot_dimension_numbers<[1], [0], [0], [1], [0, 0, 1, 1], [], []>} : vector<128x64xbf16>, vector<64x64xbf16>, vector<128x64xf32> -> vector<128x64xf32>
    %15 = arith.addf %9, %14 : vector<128x64xf32>
    %16 = vector.extract_strided_slice %1 {offsets = [0, 0, 2, 0], sizes = [1, 8, 16, 64], strides = [1, 1, 1, 1]} : vector<1x10x18x64xbf16> to vector<1x8x16x64xbf16>
    %17 = vector.shape_cast %16 : vector<1x8x16x64xbf16> to vector<128x64xbf16>
    %18 = vector.extract_strided_slice %2 {offsets = [0, 2, 0, 0], sizes = [1, 1, 64, 64], strides = [1, 1, 1, 1]} : vector<3x3x64x64xbf16> to vector<1x1x64x64xbf16>
    %19 = vector.shape_cast %18 : vector<1x1x64x64xbf16> to vector<64x64xbf16>
    %cst_10 = arith.constant dense<0.000000e+00> : vector<128x64xf32>
    %20 = tpu.matmul %17, %19, %cst_10 {dimension_numbers = #tpu.dot_dimension_numbers<[1], [0], [0], [1], [0, 0, 1, 1], [], []>} : vector<128x64xbf16>, vector<64x64xbf16>, vector<128x64xf32> -> vector<128x64xf32>
    %21 = arith.addf %15, %20 : vector<128x64xf32>
    %22 = vector.extract_strided_slice %1 {offsets = [0, 1, 0, 0], sizes = [1, 8, 16, 64], strides = [1, 1, 1, 1]} : vector<1x10x18x64xbf16> to vector<1x8x16x64xbf16>
    %23 = vector.shape_cast %22 : vector<1x8x16x64xbf16> to vector<128x64xbf16>
    %24 = vector.extract_strided_slice %2 {offsets = [1, 0, 0, 0], sizes = [1, 1, 64, 64], strides = [1, 1, 1, 1]} : vector<3x3x64x64xbf16> to vector<1x1x64x64xbf16>
    %25 = vector.shape_cast %24 : vector<1x1x64x64xbf16> to vector<64x64xbf16>
    %cst_11 = arith.constant dense<0.000000e+00> : vector<128x64xf32>
    %26 = tpu.matmul %23, %25, %cst_11 {dimension_numbers = #tpu.dot_dimension_numbers<[1], [0], [0], [1], [0, 0, 1, 1], [], []>} : vector<128x64xbf16>, vector<64x64xbf16>, vector<128x64xf32> -> vector<128x64xf32>
    %27 = arith.addf %21, %26 : vector<128x64xf32>
    %28 = vector.extract_strided_slice %1 {offsets = [0, 1, 1, 0], sizes = [1, 8, 16, 64], strides = [1, 1, 1, 1]} : vector<1x10x18x64xbf16> to vector<1x8x16x64xbf16>
    %29 = vector.shape_cast %28 : vector<1x8x16x64xbf16> to vector<128x64xbf16>
    %30 = vector.extract_strided_slice %2 {offsets = [1, 1, 0, 0], sizes = [1, 1, 64, 64], strides = [1, 1, 1, 1]} : vector<3x3x64x64xbf16> to vector<1x1x64x64xbf16>
    %31 = vector.shape_cast %30 : vector<1x1x64x64xbf16> to vector<64x64xbf16>
    %cst_12 = arith.constant dense<0.000000e+00> : vector<128x64xf32>
    %32 = tpu.matmul %29, %31, %cst_12 {dimension_numbers = #tpu.dot_dimension_numbers<[1], [0], [0], [1], [0, 0, 1, 1], [], []>} : vector<128x64xbf16>, vector<64x64xbf16>, vector<128x64xf32> -> vector<128x64xf32>
    %33 = arith.addf %27, %32 : vector<128x64xf32>
    %34 = vector.extract_strided_slice %1 {offsets = [0, 1, 2, 0], sizes = [1, 8, 16, 64], strides = [1, 1, 1, 1]} : vector<1x10x18x64xbf16> to vector<1x8x16x64xbf16>
    %35 = vector.shape_cast %34 : vector<1x8x16x64xbf16> to vector<128x64xbf16>
    %36 = vector.extract_strided_slice %2 {offsets = [1, 2, 0, 0], sizes = [1, 1, 64, 64], strides = [1, 1, 1, 1]} : vector<3x3x64x64xbf16> to vector<1x1x64x64xbf16>
    %37 = vector.shape_cast %36 : vector<1x1x64x64xbf16> to vector<64x64xbf16>
    %cst_13 = arith.constant dense<0.000000e+00> : vector<128x64xf32>
    %38 = tpu.matmul %35, %37, %cst_13 {dimension_numbers = #tpu.dot_dimension_numbers<[1], [0], [0], [1], [0, 0, 1, 1], [], []>} : vector<128x64xbf16>, vector<64x64xbf16>, vector<128x64xf32> -> vector<128x64xf32>
    %39 = arith.addf %33, %38 : vector<128x64xf32>
    %40 = vector.extract_strided_slice %1 {offsets = [0, 2, 0, 0], sizes = [1, 8, 16, 64], strides = [1, 1, 1, 1]} : vector<1x10x18x64xbf16> to vector<1x8x16x64xbf16>
    %41 = vector.shape_cast %40 : vector<1x8x16x64xbf16> to vector<128x64xbf16>
    %42 = vector.extract_strided_slice %2 {offsets = [2, 0, 0, 0], sizes = [1, 1, 64, 64], strides = [1, 1, 1, 1]} : vector<3x3x64x64xbf16> to vector<1x1x64x64xbf16>
    %43 = vector.shape_cast %42 : vector<1x1x64x64xbf16> to vector<64x64xbf16>
    %cst_14 = arith.constant dense<0.000000e+00> : vector<128x64xf32>
    %44 = tpu.matmul %41, %43, %cst_14 {dimension_numbers = #tpu.dot_dimension_numbers<[1], [0], [0], [1], [0, 0, 1, 1], [], []>} : vector<128x64xbf16>, vector<64x64xbf16>, vector<128x64xf32> -> vector<128x64xf32>
    %45 = arith.addf %39, %44 : vector<128x64xf32>
    %46 = vector.extract_strided_slice %1 {offsets = [0, 2, 1, 0], sizes = [1, 8, 16, 64], strides = [1, 1, 1, 1]} : vector<1x10x18x64xbf16> to vector<1x8x16x64xbf16>
    %47 = vector.shape_cast %46 : vector<1x8x16x64xbf16> to vector<128x64xbf16>
    %48 = vector.extract_strided_slice %2 {offsets = [2, 1, 0, 0], sizes = [1, 1, 64, 64], strides = [1, 1, 1, 1]} : vector<3x3x64x64xbf16> to vector<1x1x64x64xbf16>
    %49 = vector.shape_cast %48 : vector<1x1x64x64xbf16> to vector<64x64xbf16>
    %cst_15 = arith.constant dense<0.000000e+00> : vector<128x64xf32>
    %50 = tpu.matmul %47, %49, %cst_15 {dimension_numbers = #tpu.dot_dimension_numbers<[1], [0], [0], [1], [0, 0, 1, 1], [], []>} : vector<128x64xbf16>, vector<64x64xbf16>, vector<128x64xf32> -> vector<128x64xf32>
    %51 = arith.addf %45, %50 : vector<128x64xf32>
    %52 = vector.extract_strided_slice %1 {offsets = [0, 2, 2, 0], sizes = [1, 8, 16, 64], strides = [1, 1, 1, 1]} : vector<1x10x18x64xbf16> to vector<1x8x16x64xbf16>
    %53 = vector.shape_cast %52 : vector<1x8x16x64xbf16> to vector<128x64xbf16>
    %54 = vector.extract_strided_slice %2 {offsets = [2, 2, 0, 0], sizes = [1, 1, 64, 64], strides = [1, 1, 1, 1]} : vector<3x3x64x64xbf16> to vector<1x1x64x64xbf16>
    %55 = vector.shape_cast %54 : vector<1x1x64x64xbf16> to vector<64x64xbf16>
    %cst_16 = arith.constant dense<0.000000e+00> : vector<128x64xf32>
    %56 = tpu.matmul %53, %55, %cst_16 {dimension_numbers = #tpu.dot_dimension_numbers<[1], [0], [0], [1], [0, 0, 1, 1], [], []>} : vector<128x64xbf16>, vector<64x64xbf16>, vector<128x64xf32> -> vector<128x64xf32>
    %57 = arith.addf %51, %56 : vector<128x64xf32>
    %cst_17 = arith.constant dense<0.000000e+00> : vector<64xf32>
    %58 = vector.multi_reduction <add>, %57, %cst_17 [0] : vector<128x64xf32> to vector<64xf32>
    %59 = vector.shape_cast %58 : vector<64xf32> to vector<1x64xf32>
    %60 = arith.mulf %57, %57 : vector<128x64xf32>
    %cst_18 = arith.constant dense<0.000000e+00> : vector<64xf32>
    %61 = vector.multi_reduction <add>, %60, %cst_18 [0] : vector<128x64xf32> to vector<64xf32>
    %62 = vector.shape_cast %61 : vector<64xf32> to vector<1x64xf32>
    %c0_i32 = arith.constant 0 : i32
    %63 = arith.cmpi eq, %arg1, %c0_i32 : i32
    %64 = arith.extui %63 : i1 to i32
    %c0_i32_19 = arith.constant 0 : i32
    %65 = arith.cmpi ne, %64, %c0_i32_19 : i32
    scf.if %65 {
      %cst_26 = arith.constant 0.000000e+00 : f32
      %71 = vector.broadcast %cst_26 : f32 to vector<1x2x64xf32>
      %c0_27 = arith.constant 0 : index
      %c0_28 = arith.constant 0 : index
      %c0_29 = arith.constant 0 : index
      %72 = vector.load %arg4[%c0_27, %c0_28, %c0_29] : memref<1x2x64xf32, #tpu.memory_space<vmem>>, vector<1x2x64xf32>
      tpu.vector_store %arg4[%c0_27, %c0_28, %c0_29], %71 {strides = array<i32>} : memref<1x2x64xf32, #tpu.memory_space<vmem>>, vector<1x2x64xf32>,
    } else {
    }
    %c0_20 = arith.constant 0 : index
    %c0_21 = arith.constant 0 : index
    %c0_22 = arith.constant 0 : index
    %66 = vector.load %arg4[%c0_20, %c0_21, %c0_22] : memref<1x2x64xf32, #tpu.memory_space<vmem>>, vector<1x2x64xf32>
    %67 = tpu.concatenate %59, %62 in 0 : vector<1x64xf32>, vector<1x64xf32> -> vector<2x64xf32>
    %68 = vector.shape_cast %67 : vector<2x64xf32> to vector<1x2x64xf32>
    %69 = arith.addf %66, %68 : vector<1x2x64xf32>
    %c0_23 = arith.constant 0 : index
    %c0_24 = arith.constant 0 : index
    %c0_25 = arith.constant 0 : index
    %70 = vector.load %arg4[%c0_23, %c0_24, %c0_25] : memref<1x2x64xf32, #tpu.memory_space<vmem>>, vector<1x2x64xf32>
    tpu.vector_store %arg4[%c0_23, %c0_24, %c0_25], %69 {strides = array<i32>} : memref<1x2x64xf32, #tpu.memory_space<vmem>>, vector<1x2x64xf32>,
    return
  }
  func.func @transform_0(%arg0: i32, %arg1: i32) -> (i32, i32, i32, i32, i32) {
    %c0_i32 = arith.constant 0 : i32
    %c0_i32_0 = arith.constant 0 : i32
    %c0_i32_1 = arith.constant 0 : i32
    %c0_i32_2 = arith.constant 0 : i32
    return %arg0, %arg1, %c0_i32, %c0_i32_0, %c0_i32_1 : i32, i32, i32, i32, i32
  }
  func.func @transform_1(%arg0: i32, %arg1: i32) -> (i32, i32, i32, i32) {
    %c0_i32 = arith.constant 0 : i32
    %c0_i32_0 = arith.constant 0 : i32
    %c0_i32_1 = arith.constant 0 : i32
    %c0_i32_2 = arith.constant 0 : i32
    %c0_i32_3 = arith.constant 0 : i32
    return %c0_i32, %c0_i32_0, %c0_i32_1, %c0_i32_2 : i32, i32, i32, i32
  }
  func.func @transform_2(%arg0: i32, %arg1: i32) -> (i32, i32, i32) {
    %c0_i32 = arith.constant 0 : i32
    %c0_i32_0 = arith.constant 0 : i32
    %c0_i32_1 = arith.constant 0 : i32
    return %arg0, %c0_i32, %c0_i32_0 : i32, i32, i32
  }
}

</mosaic_0001>

<llo_original>
// kernel: tpu_custom_call.1
$region0: #{tpu_custom_call.1}
  #allocation0 [shape = 'u32[]', space=smem, size = 0x4, offset = 0x4, fixed_abs, tag = 'smem constant byte address 0x4 - core index']
  #allocation1 [shape = 'u32[144,128]{1,0:T(1,128)}', space=vmem, size = 0x12000, scoped, tag = 'internal scratch']
  %s0 = inlined_call_operand.vmem [shape: bf16[2,2,10,18,64], index: 0, kind: input, shape index: {}]
  %s1 = inlined_call_operand.vmem [shape: bf16[3,3,64,64], index: 1, kind: input, shape index: {}]
  %s2 = inlined_call_operand.hbm [shape: f32[2,2,64], index: 2, kind: output, shape index: {}]
  %s3 = sld [smem:[#allocation0]]
  $region45: #{tpu_custom_call.1} parent=0
    _
  %s5 = ssub.s32 1, %s3
  %s6 = scalar_select 0, %s5, %s3
  $region1: #{tpu_custom_call.1} parent=0
    #allocation2 [shape = 'u8[2048]{0}', space=vmem, size = 0x800, scoped, tag = 'output window, operand 0']
    #allocation3 [shape = 's32[2]{0}', space=sflag, size = 0x8, scoped, tag = 'scoped memory for tpu_custom_call.1']
    %7 = vsyncpa [#allocation3], 0
    %s8 = scalar_lea.sflag [#allocation3], 1
    %9 = vsyncpa %s8, 0
    loop: start=0, step=1, limit=6
    $region2: #{tpu_custom_call.1} parent=1 // loop_pre_header
      _
    $region3: #{tpu_custom_call.1} parent=1 // loop_header
      %s11 = sphi 0, %s15
      %p12 = scmp.ge.s32.totalorder %s11, 6
      %s18 = sphi 0, %s30
      %s19 = sphi 0, %s26
      %s20 = sphi 0, %s18
      %s21 = sphi 0, %s19
      %s22 = sphi 0, %s20
      %s23 = sphi 0, %s21
      %s35 = sphi 0, %s37
      %s38 = sphi 0, %s35
      %s39 = sphi 0, %s38
      %s55 = sphi 0, %s39
      %s59 = sphi 0, %s59
      %s61 = sphi 0, %s59
      %s62 = sphi 0, %s61
      %s76 = sphi 0, %s62
      %s82 = sphi 0, %s84
      %s85 = sphi 0, %s82
      %s86 = sphi 0, %s85
      %s102 = sphi 0, %s86
    $region4: #{tpu_custom_call.1} parent=1 // loop_header_branch
      %14 = sbr.rel (%p12) target = $region8
    $region5: #{tpu_custom_call.1} parent=1 // loop_body
      %s16 = ssub.s32 %s11, 1
      %s17 = ssub.s32 %s11, 2
      %s24 = sadd.s32 1, %s19
      %p25 = scmp.ge.s32.totalorder %s24, 2
      %s26 = scalar_select %p25, 0, %s24
      %s27 = sadd.s32 1, %s18
      %s28 = scalar_select %p25, %s27, %s18
      %p29 = scmp.ge.s32.totalorder %s28, 2
      %s30 = scalar_select %p29, 0, %s28
      %s31 = ssub.s32 %s18, %s30
      %s32 = ssub.s32 %s19, %s26
      %s33 = sor.u32 %s31, %s32
      %p34 = scmp.eq.s32.totalorder %s33, 0
      %s36 = sadd.s32 %s35, 1
      %s37 = scalar_select %p34, %s35, %s36
      %p40 = pneg %p34
      %p41 = scmp.eq.s32.totalorder %s11, 3
      %p42 = por %p40, %p41
      %p43 = scmp.ne.s32.totalorder %s35, %s38
      %p44 = scmp.eq.s32.totalorder %s11, 0
      %p45 = por %p43, %p44
      %p46 = scmp.ne.s32.totalorder %s35, %s38
      %p47 = scmp.eq.s32.totalorder %s16, 3
      %p48 = por %p46, %p47
      %p49 = scmp.ne.s32.totalorder %s38, %s39
      %p50 = scmp.eq.s32.totalorder %s16, 0
      %p51 = por %p49, %p50
      %p52 = scmp.ne.s32.totalorder %s38, %s39
      %p53 = scmp.eq.s32.totalorder %s17, 3
      %p54 = por %p52, %p53
      %p56 = scmp.ne.s32.totalorder %s39, %s55
      %p57 = scmp.eq.s32.totalorder %s17, 0
      %p58 = por %p56, %p57
      %s60 = sadd.s32 %s59, 1
      %p63 = scmp.eq.s32.totalorder %s11, 3
      %p64 = scmp.ne.s32.totalorder %s59, %s61
      %p65 = scmp.eq.s32.totalorder %s11, 0
      %p66 = por %p64, %p65
      %p67 = scmp.ne.s32.totalorder %s59, %s61
      %p68 = scmp.eq.s32.totalorder %s16, 3
      %p69 = por %p67, %p68
      %p70 = scmp.ne.s32.totalorder %s61, %s62
      %p71 = scmp.eq.s32.totalorder %s16, 0
      %p72 = por %p70, %p71
      %p73 = scmp.ne.s32.totalorder %s61, %s62
      %p74 = scmp.eq.s32.totalorder %s17, 3
      %p75 = por %p73, %p74
      %p77 = scmp.ne.s32.totalorder %s62, %s76
      %p78 = scmp.eq.s32.totalorder %s17, 0
      %p79 = por %p77, %p78
      %s80 = ssub.s32 %s18, %s30
      %p81 = scmp.eq.s32.totalorder %s80, 0
      %s83 = sadd.s32 %s82, 1
      %s84 = scalar_select %p81, %s82, %s83
      %p87 = pneg %p81
      %p88 = scmp.eq.s32.totalorder %s11, 3
      %p89 = por %p87, %p88
      %p90 = scmp.ne.s32.totalorder %s82, %s85
      %p91 = scmp.eq.s32.totalorder %s11, 0
      %p92 = por %p90, %p91
      %p93 = scmp.ne.s32.totalorder %s82, %s85
      %p94 = scmp.eq.s32.totalorder %s16, 3
      %p95 = por %p93, %p94
      %p96 = scmp.ne.s32.totalorder %s85, %s86
      %p97 = scmp.eq.s32.totalorder %s16, 0
      %p98 = por %p96, %p97
      %p99 = scmp.ne.s32.totalorder %s85, %s86
      %p100 = scmp.eq.s32.totalorder %s17, 3
      %p101 = por %p99, %p100
      %p103 = scmp.ne.s32.totalorder %s86, %s102
      %p104 = scmp.eq.s32.totalorder %s17, 0
      %p105 = por %p103, %p104
      %p106 = scmp.le.s32.totalorder 1, %s11
      %p107 = scmp.lt.s32.totalorder %s11, 5
      %p108 = pnand %p106, %p107
      %p109 = pneg %p108
      // Predicated region
      $region9: #{tpu_custom_call.1} parent=5 // pred_check
        _
      $region10: #{tpu_custom_call.1} parent=5 // pred_check_branch
        %111 = sbr.rel (%p108) target = $region12
      $region11: #{tpu_custom_call.1} parent=5 // pred_region
        %s112 = ssub.s32 %s11, 1
        // Predicated region
        $region13: #{tpu_custom_call.1} parent=11 // pred_check
          %p113 = pneg %p72
        $region14: #{tpu_custom_call.1} parent=11 // pred_check_branch
          %115 = sbr.rel (%p113) target = $region16
        $region15: #{tpu_custom_call.1} parent=11 // pred_region
          _
        $region16: #{tpu_custom_call.1} parent=11 // pred_fallthru
          _
      $region12: #{tpu_custom_call.1} parent=5 // pred_fallthru
        _
      %p116 = scmp.lt.s32.totalorder %s11, 4
      // Predicated region
      $region17: #{tpu_custom_call.1} parent=5 // pred_check
        %p117 = pneg %p116
      $region18: #{tpu_custom_call.1} parent=5 // pred_check_branch
        %119 = sbr.rel (%p117) target = $region20
      $region19: #{tpu_custom_call.1} parent=5 // pred_region
        // Predicated region
        $region21: #{tpu_custom_call.1} parent=19 // pred_check
          %p120 = pneg %p45
        $region22: #{tpu_custom_call.1} parent=19 // pred_check_branch
          %122 = sbr.rel (%p120) target = $region24
        $region23: #{tpu_custom_call.1} parent=19 // pred_region
          %p123 = scmp.lt.s32.totalorder %s18, 1
          %s124 = scalar_select %p123, %s18, 1
          %p125 = scmp.lt.s32.totalorder %s19, 1
          %s126 = scalar_select %p125, %s19, 1
          %s127 = smul.addr %s126, 30
          %s128 = smul.addr %s124, 60
          %s129 = sadd.s32 %s127, %s128
          %s130 = smul.addr %s129, 4
          %s131 = scalar_lea.vmem %s0, %s130
        $region24: #{tpu_custom_call.1} parent=19 // pred_fallthru
          _
      $region20: #{tpu_custom_call.1} parent=5 // pred_fallthru
        _
      %p132 = scmp.le.s32.totalorder 1, %s11
      %p133 = scmp.lt.s32.totalorder %s11, 5
      %p134 = pnand %p132, %p133
      %p135 = pneg %p134
      // Predicated region
      $region25: #{tpu_custom_call.1} parent=5 // pred_check
        _
      $region26: #{tpu_custom_call.1} parent=5 // pred_check_branch
        %137 = sbr.rel (%p134) target = $region28
      $region27: #{tpu_custom_call.1} parent=5 // pred_region
        %s138 = ssub.s32 %s11, 1
        %p139 = scmp.lt.s32.totalorder %s20, 1
        %s140 = scalar_select %p139, %s20, 1
        %p141 = scmp.lt.s32.totalorder %s21, 1
        %s142 = scalar_select %p141, %s21, 1
        %s143 = smul.addr %s142, 30
        %s144 = smul.addr %s140, 60
        %s145 = sadd.s32 %s143, %s144
        %s146 = smul.addr %s145, 4
        %s147 = scalar_lea.vmem %s0, %s146
        %p148 = pneg %p51
        %p149 = pneg %p48
        %p150 = pneg %p72
        %p151 = pneg %p69
        %p152 = pneg %p98
        %p153 = pneg %p95
        %s154 = sand.u32 %s85, 1
        %s155 = scalar_lea.sflag [#allocation3], %s154
        %s156 = sand.u32 %s85, 1
        %s157 = smul.addr %s156, 2
        %s158 = scalar_lea.vmem [#allocation2], %s157
        %p159 = scmp.lt.s32.totalorder %s20, 1
        %s160 = scalar_select %p159, %s20, 1
        %p161 = scmp.lt.s32.totalorder %s21, 1
        %s162 = scalar_select %p161, %s21, 1
        %s163 = smul.addr %s162, 30
        %s164 = smul.addr %s160, 60
        %s165 = sadd.s32 %s163, %s164
        %s166 = smul.addr %s165, 4
        %s167 = scalar_lea.vmem %s0, %s166
        %v169 = vld [vmem:[%s167] sm:$0xf]
        %v170 = vld [vmem:[%s167 + $0x4] sm:$0xf]
        %v171 = vld [vmem:[%s167 + $0x8] sm:$0x1]
        %v172 = vld [vmem:[%s167 + $0xc] sm:$0xf]
        %v173 = vld [vmem:[%s167 + $0x10] sm:$0xf]
        %v174 = vld [vmem:[%s167 + $0x14] sm:$0x1]
        %v175 = vld [vmem:[%s167 + $0x18] sm:$0xf]
        %v176 = vld [vmem:[%s167 + $0x1c] sm:$0xf]
        %v177 = vld [vmem:[%s167 + $0x20] sm:$0x1]
        %v178 = vld [vmem:[%s167 + $0x24] sm:$0xf]
        %v179 = vld [vmem:[%s167 + $0x28] sm:$0xf]
        %v180 = vld [vmem:[%s167 + $0x2c] sm:$0x1]
        %v181 = vld [vmem:[%s167 + $0x30] sm:$0xf]
        %v182 = vld [vmem:[%s167 + $0x34] sm:$0xf]
        %v183 = vld [vmem:[%s167 + $0x38] sm:$0x1]
        %v184 = vld [vmem:[%s167 + $0x3c] sm:$0xf]
        %v185 = vld [vmem:[%s167 + $0x40] sm:$0xf]
        %v186 = vld [vmem:[%s167 + $0x44] sm:$0x1]
        %v187 = vld [vmem:[%s167 + $0x48] sm:$0xf]
        %v188 = vld [vmem:[%s167 + $0x4c] sm:$0xf]
        %v189 = vld [vmem:[%s167 + $0x50] sm:$0x1]
        %v190 = vld [vmem:[%s167 + $0x54] sm:$0xf]
        %v191 = vld [vmem:[%s167 + $0x58] sm:$0xf]
        %v192 = vld [vmem:[%s167 + $0x5c] sm:$0x1]
        %v193 = vld [vmem:[%s167 + $0x60] sm:$0xf]
        %v194 = vld [vmem:[%s167 + $0x64] sm:$0xf]
        %v195 = vld [vmem:[%s167 + $0x68] sm:$0x1]
        %v196 = vld [vmem:[%s167 + $0x6c] sm:$0xf]
        %v197 = vld [vmem:[%s167 + $0x70] sm:$0xf]
        %v198 = vld [vmem:[%s167 + $0x74] sm:$0x1]
        %v199 = vld [vmem:[%s1] sm:$0xf]
        %v200 = vld [vmem:[%s1 + $0x4] sm:$0xf]
        %v201 = vld [vmem:[%s1 + $0x8] sm:$0xf]
        %v202 = vld [vmem:[%s1 + $0xc] sm:$0xf]
        %v203 = vld [vmem:[%s1 + $0x10] sm:$0xf]
        %v204 = vld [vmem:[%s1 + $0x14] sm:$0xf]
        %v205 = vld [vmem:[%s1 + $0x18] sm:$0xf]
        %v206 = vld [vmem:[%s1 + $0x1c] sm:$0xf]
        %v207 = vld [vmem:[%s1 + $0x20] sm:$0xf]
        %v208 = vld [vmem:[%s1 + $0x24] sm:$0xf]
        %v209 = vld [vmem:[%s1 + $0x28] sm:$0xf]
        %v210 = vld [vmem:[%s1 + $0x2c] sm:$0xf]
        %v211 = vld [vmem:[%s1 + $0x30] sm:$0xf]
        %v212 = vld [vmem:[%s1 + $0x34] sm:$0xf]
        %v213 = vld [vmem:[%s1 + $0x38] sm:$0xf]
        %v214 = vld [vmem:[%s1 + $0x3c] sm:$0xf]
        %v215 = vld [vmem:[%s1 + $0x40] sm:$0xf]
        %v216 = vld [vmem:[%s1 + $0x44] sm:$0xf]
        %v217 = vld [vmem:[%s1 + $0x48] sm:$0xf]
        %v218 = vld [vmem:[%s1 + $0x4c] sm:$0xf]
        %v219 = vld [vmem:[%s1 + $0x50] sm:$0xf]
        %v220 = vld [vmem:[%s1 + $0x54] sm:$0xf]
        %v221 = vld [vmem:[%s1 + $0x58] sm:$0xf]
        %v222 = vld [vmem:[%s1 + $0x5c] sm:$0xf]
        %v223 = vld [vmem:[%s1 + $0x60] sm:$0xf]
        %v224 = vld [vmem:[%s1 + $0x64] sm:$0xf]
        %v225 = vld [vmem:[%s1 + $0x68] sm:$0xf]
        %v226 = vld [vmem:[%s1 + $0x6c] sm:$0xf]
        %v227 = vld [vmem:[%s1 + $0x70] sm:$0xf]
        %v228 = vld [vmem:[%s1 + $0x74] sm:$0xf]
        %v229 = vld [vmem:[%s1 + $0x78] sm:$0xf]
        %v230 = vld [vmem:[%s1 + $0x7c] sm:$0xf]
        %v231 = vld [vmem:[%s1 + $0x80] sm:$0xf]
        %v232 = vld [vmem:[%s1 + $0x84] sm:$0xf]
        %v233 = vld [vmem:[%s1 + $0x88] sm:$0xf]
        %v234 = vld [vmem:[%s1 + $0x8c] sm:$0xf]
        %v235 = vld [vmem:[%s1 + $0x90] sm:$0xf]
        %v236 = vld [vmem:[%s1 + $0x94] sm:$0xf]
        %v237 = vld [vmem:[%s1 + $0x98] sm:$0xf]
        %v238 = vld [vmem:[%s1 + $0x9c] sm:$0xf]
        %v239 = vld [vmem:[%s1 + $0xa0] sm:$0xf]
        %v240 = vld [vmem:[%s1 + $0xa4] sm:$0xf]
        %v241 = vld [vmem:[%s1 + $0xa8] sm:$0xf]
        %v242 = vld [vmem:[%s1 + $0xac] sm:$0xf]
        %v243 = vld [vmem:[%s1 + $0xb0] sm:$0xf]
        %v244 = vld [vmem:[%s1 + $0xb4] sm:$0xf]
        %v245 = vld [vmem:[%s1 + $0xb8] sm:$0xf]
        %v246 = vld [vmem:[%s1 + $0xbc] sm:$0xf]
        %v247 = vld [vmem:[%s1 + $0xc0] sm:$0xf]
        %v248 = vld [vmem:[%s1 + $0xc4] sm:$0xf]
        %v249 = vld [vmem:[%s1 + $0xc8] sm:$0xf]
        %v250 = vld [vmem:[%s1 + $0xcc] sm:$0xf]
        %v251 = vld [vmem:[%s1 + $0xd0] sm:$0xf]
        %v252 = vld [vmem:[%s1 + $0xd4] sm:$0xf]
        %v253 = vld [vmem:[%s1 + $0xd8] sm:$0xf]
        %v254 = vld [vmem:[%s1 + $0xdc] sm:$0xf]
        %v255 = vld [vmem:[%s1 + $0xe0] sm:$0xf]
        %v256 = vld [vmem:[%s1 + $0xe4] sm:$0xf]
        %v257 = vld [vmem:[%s1 + $0xe8] sm:$0xf]
        %v258 = vld [vmem:[%s1 + $0xec] sm:$0xf]
        %v259 = vld [vmem:[%s1 + $0xf0] sm:$0xf]
        %v260 = vld [vmem:[%s1 + $0xf4] sm:$0xf]
        %v261 = vld [vmem:[%s1 + $0xf8] sm:$0xf]
        %v262 = vld [vmem:[%s1 + $0xfc] sm:$0xf]
        %v263 = vld [vmem:[%s1 + $0x100] sm:$0xf]
        %v264 = vld [vmem:[%s1 + $0x104] sm:$0xf]
        %v265 = vld [vmem:[%s1 + $0x108] sm:$0xf]
        %v266 = vld [vmem:[%s1 + $0x10c] sm:$0xf]
        %v267 = vld [vmem:[%s1 + $0x110] sm:$0xf]
        %v268 = vld [vmem:[%s1 + $0x114] sm:$0xf]
        %v269 = vld [vmem:[%s1 + $0x118] sm:$0xf]
        %v270 = vld [vmem:[%s1 + $0x11c] sm:$0xf]
        %vm271 = vsmask.f32 3328
        %vm272 = vsmask.f32 7440
        %vm273 = vmor %vm271, %vm272
        %v275 = vshrl.u32 %v169, 16
        %v277 = vrot.slane %v275, 4
        %v278 = vshll.u32 %v169, 16
        %v280 = vrot.slane %v278, 5
        %v281 = vor.u32 %v277, %v280
        %v282 = vrot.slane %v281, 4
        %v284 = vshll.u32 %v170, 16
        %v286 = vrot.slane %v284, 5
        %v287 = vsel %vm273, %v282, %v286
        %v288 = vshrl.u32 %v170, 16
        %v290 = vrot.slane %v288, 4
        %v291 = vor.u32 %v290, %v286
        %v292 = vrot.slane %v291, 4
        %v294 = vshll.u32 %v171, 16
        %v296 = vrot.slane %v294, 5
        %v297 = vsel %vm273, %v292, %v296
        %v299 = vshrl.u32 %v172, 16
        %v301 = vrot.slane %v299, 4
        %v302 = vshll.u32 %v172, 16
        %v304 = vrot.slane %v302, 5
        %v305 = vor.u32 %v301, %v304
        %v306 = vrot.slane %v305, 4
        %v308 = vshll.u32 %v173, 16
        %v310 = vrot.slane %v308, 5
        %v311 = vsel %vm273, %v306, %v310
        %v312 = vshrl.u32 %v173, 16
        %v314 = vrot.slane %v312, 4
        %v315 = vor.u32 %v314, %v310
        %v316 = vrot.slane %v315, 4
        %v318 = vshll.u32 %v174, 16
        %v320 = vrot.slane %v318, 5
        %v321 = vsel %vm273, %v316, %v320
        %v323 = vshrl.u32 %v175, 16
        %v325 = vrot.slane %v323, 4
        %v326 = vshll.u32 %v175, 16
        %v328 = vrot.slane %v326, 5
        %v329 = vor.u32 %v325, %v328
        %v330 = vrot.slane %v329, 4
        %v332 = vshll.u32 %v176, 16
        %v334 = vrot.slane %v332, 5
        %v335 = vsel %vm273, %v330, %v334
        %v336 = vshrl.u32 %v176, 16
        %v338 = vrot.slane %v336, 4
        %v339 = vor.u32 %v338, %v334
        %v340 = vrot.slane %v339, 4
        %v342 = vshll.u32 %v177, 16
        %v344 = vrot.slane %v342, 5
        %v345 = vsel %vm273, %v340, %v344
        %v347 = vshrl.u32 %v178, 16
        %v349 = vrot.slane %v347, 4
        %v350 = vshll.u32 %v178, 16
        %v352 = vrot.slane %v350, 5
        %v353 = vor.u32 %v349, %v352
        %v354 = vrot.slane %v353, 4
        %v356 = vshll.u32 %v179, 16
        %v358 = vrot.slane %v356, 5
        %v359 = vsel %vm273, %v354, %v358
        %v360 = vshrl.u32 %v179, 16
        %v362 = vrot.slane %v360, 4
        %v363 = vor.u32 %v362, %v358
        %v364 = vrot.slane %v363, 4
        %v366 = vshll.u32 %v180, 16
        %v368 = vrot.slane %v366, 5
        %v369 = vsel %vm273, %v364, %v368
        %v371 = vshrl.u32 %v181, 16
        %v373 = vrot.slane %v371, 4
        %v374 = vshll.u32 %v181, 16
        %v376 = vrot.slane %v374, 5
        %v377 = vor.u32 %v373, %v376
        %v378 = vrot.slane %v377, 4
        %v380 = vshll.u32 %v182, 16
        %v382 = vrot.slane %v380, 5
        %v383 = vsel %vm273, %v378, %v382
        %v384 = vshrl.u32 %v182, 16
        %v386 = vrot.slane %v384, 4
        %v387 = vor.u32 %v386, %v382
        %v388 = vrot.slane %v387, 4
        %v390 = vshll.u32 %v183, 16
        %v392 = vrot.slane %v390, 5
        %v393 = vsel %vm273, %v388, %v392
        %v395 = vshrl.u32 %v184, 16
        %v397 = vrot.slane %v395, 4
        %v398 = vshll.u32 %v184, 16
        %v400 = vrot.slane %v398, 5
        %v401 = vor.u32 %v397, %v400
        %v402 = vrot.slane %v401, 4
        %v404 = vshll.u32 %v185, 16
        %v406 = vrot.slane %v404, 5
        %v407 = vsel %vm273, %v402, %v406
        %v408 = vshrl.u32 %v185, 16
        %v410 = vrot.slane %v408, 4
        %v411 = vor.u32 %v410, %v406
        %v412 = vrot.slane %v411, 4
        %v414 = vshll.u32 %v186, 16
        %v416 = vrot.slane %v414, 5
        %v417 = vsel %vm273, %v412, %v416
        %v419 = vshrl.u32 %v187, 16
        %v421 = vrot.slane %v419, 4
        %v422 = vshll.u32 %v187, 16
        %v424 = vrot.slane %v422, 5
        %v425 = vor.u32 %v421, %v424
        %v426 = vrot.slane %v425, 4
        %v428 = vshll.u32 %v188, 16
        %v430 = vrot.slane %v428, 5
        %v431 = vsel %vm273, %v426, %v430
        %v432 = vshrl.u32 %v188, 16
        %v434 = vrot.slane %v432, 4
        %v435 = vor.u32 %v434, %v430
        %v436 = vrot.slane %v435, 4
        %v438 = vshll.u32 %v189, 16
        %v440 = vrot.slane %v438, 5
        %v441 = vsel %vm273, %v436, %v440
        %v443 = vshrl.u32 %v190, 16
        %v445 = vrot.slane %v443, 4
        %v446 = vshll.u32 %v190, 16
        %v448 = vrot.slane %v446, 5
        %v449 = vor.u32 %v445, %v448
        %v450 = vrot.slane %v449, 4
        %v452 = vshll.u32 %v191, 16
        %v454 = vrot.slane %v452, 5
        %v455 = vsel %vm273, %v450, %v454
        %v456 = vshrl.u32 %v191, 16
        %v458 = vrot.slane %v456, 4
        %v459 = vor.u32 %v458, %v454
        %v460 = vrot.slane %v459, 4
        %v462 = vshll.u32 %v192, 16
        %v464 = vrot.slane %v462, 5
        %v465 = vsel %vm273, %v460, %v464
        %v466 = vunpack.c.l.b16 %v287
        %v467 = vunpack.c.l.b16 %v297
        %v468 = vunpack.c.l.b16 %v311
        %v469 = vunpack.c.l.b16 %v321
        %v470 = vunpack.c.l.b16 %v335
        %v471 = vunpack.c.l.b16 %v345
        %v472 = vunpack.c.l.b16 %v359
        %v473 = vunpack.c.l.b16 %v369
        %v474 = vunpack.c.l.b16 %v383
        %v475 = vunpack.c.l.b16 %v393
        %v476 = vunpack.c.l.b16 %v407
        %v477 = vunpack.c.l.b16 %v417
        %v478 = vunpack.c.l.b16 %v431
        %v479 = vunpack.c.l.b16 %v441
        %v480 = vunpack.c.l.b16 %v455
        %v481 = vunpack.c.l.b16 %v465
        %v482 = vpack.c.b16 %v467, %v466
        %v483 = vpack.c.b16 %v469, %v468
        %v484 = vpack.c.b16 %v471, %v470
        %v485 = vpack.c.b16 %v473, %v472
        %v486 = vpack.c.b16 %v475, %v474
        %v487 = vpack.c.b16 %v477, %v476
        %v488 = vpack.c.b16 %v479, %v478
        %v489 = vpack.c.b16 %v481, %v480
        %v498 = vunpack.c.l.b16 %v207
        %v499 = vunpack.c.l.b16 %v208
        %v500 = vunpack.c.l.b16 %v209
        %v501 = vunpack.c.l.b16 %v210
        %v502 = vunpack.c.l.b16 %v211
        %v503 = vunpack.c.l.b16 %v212
        %v504 = vunpack.c.l.b16 %v213
        %v505 = vunpack.c.l.b16 %v214
        %v506 = vpack.c.b16 %v499, %v498
        %v507 = vpack.c.b16 %v501, %v500
        %v508 = vpack.c.b16 %v503, %v502
        %v509 = vpack.c.b16 %v505, %v504
        %vm514 = vcmask 523264
        %v516 = vsel %vm514, %v482, 0
        %v519 = vsel %vm514, %v483, 0
        %v522 = vsel %vm514, %v484, 0
        %v525 = vsel %vm514, %v485, 0
        %v528 = vsel %vm514, %v486, 0
        %v531 = vsel %vm514, %v487, 0
        %v534 = vsel %vm514, %v488, 0
        %v537 = vsel %vm514, %v489, 0
        %539 = vmatprep.subr.bf16.mxu0 0
        %540 = vmatpush1.bf16.msra.mxu0 0
        %541 = vmatprep.subr.bf16.mxu0 0
        %542 = vmatpush1.bf16.msra.mxu0 0
        %543 = vmatprep.subr.bf16.mxu0 0
        %544 = vmatpush1.bf16.msra.mxu0 0
        %545 = vmatprep.subr.bf16.mxu0 0
        %546 = vmatpush1.bf16.msra.mxu0 0
        %547 = vmatprep.subr.bf16.mxu0 0
        %548 = vmatpush1.bf16.msra.mxu0 %v509
        %549 = vmatprep.subr.bf16.mxu0 0
        %550 = vmatpush1.bf16.msra.mxu0 %v508
        %551 = vmatprep.subr.bf16.mxu0 0
        %552 = vmatpush1.bf16.msra.mxu0 %v507
        %553 = vmatprep.subr.bf16.mxu0 0
        %554 = vmatpush1.bf16.msra.mxu0 %v506
        %555 = vmatprep.subr.bf16.mxu0 0
        %556 = vmatpush2.bf16.msra.mxu0 0
        %557 = vmatprep.subr.bf16.mxu0 0
        %558 = vmatpush2.bf16.msra.mxu0 0
        %559 = vmatprep.subr.bf16.mxu0 0
        %560 = vmatpush2.bf16.msra.mxu0 0
        %561 = vmatprep.subr.bf16.mxu0 0
        %562 = vmatpush2.bf16.msra.mxu0 0
        %563 = vmatprep.subr.bf16.mxu0 0
        %564 = vmatpush2.bf16.msra.mxu0 0
        %565 = vmatprep.subr.bf16.mxu0 0
        %566 = vmatpush2.bf16.msra.mxu0 0
        %567 = vmatprep.subr.bf16.mxu0 0
        %568 = vmatpush2.bf16.msra.mxu0 0
        %569 = vmatprep.subr.bf16.mxu0 0
        %570 = vmatpush2.bf16.msra.mxu0 0
        %571 = vmatprep.mubr.bf16.mxu0 0
        %572 = vmatmul.mubr.bf16.gmra.mxu0 %v516
        %v573 = vpop.f32.mrf.mxu0
        %v574 = vadd.f32 0.0, %v573
        %v575 = vpop.f32.mrf.mxu0
        %v576 = vpop.f32.mrf.mxu0
        %v577 = vadd.f32 0.0, %v576
        %v578 = vpop.f32.mrf.mxu0
        %579 = vmatprep.mubr.bf16.mxu0 0
        %580 = vmatmul.mubr.bf16.gmra.mxu0 %v519
        %v581 = vpop.f32.mrf.mxu0
        %v582 = vadd.f32 0.0, %v581
        %v583 = vpop.f32.mrf.mxu0
        %v584 = vpop.f32.mrf.mxu0
        %v585 = vadd.f32 0.0, %v584
        %v586 = vpop.f32.mrf.mxu0
        %587 = vmatprep.mubr.bf16.mxu0 0
        %588 = vmatmul.mubr.bf16.gmra.mxu0 %v522
        %v589 = vpop.f32.mrf.mxu0
        %v590 = vadd.f32 0.0, %v589
        %v591 = vpop.f32.mrf.mxu0
        %v592 = vpop.f32.mrf.mxu0
        %v593 = vadd.f32 0.0, %v592
        %v594 = vpop.f32.mrf.mxu0
        %595 = vmatprep.mubr.bf16.mxu0 0
        %596 = vmatmul.mubr.bf16.gmra.mxu0 %v525
        %v597 = vpop.f32.mrf.mxu0
        %v598 = vadd.f32 0.0, %v597
        %v599 = vpop.f32.mrf.mxu0
        %v600 = vpop.f32.mrf.mxu0
        %v601 = vadd.f32 0.0, %v600
        %v602 = vpop.f32.mrf.mxu0
        %603 = vmatprep.mubr.bf16.mxu0 0
        %604 = vmatmul.mubr.bf16.gmra.mxu0 %v528
        %v605 = vpop.f32.mrf.mxu0
        %v606 = vadd.f32 0.0, %v605
        %v607 = vpop.f32.mrf.mxu0
        %v608 = vpop.f32.mrf.mxu0
        %v609 = vadd.f32 0.0, %v608
        %v610 = vpop.f32.mrf.mxu0
        %611 = vmatprep.mubr.bf16.mxu0 0
        %612 = vmatmul.mubr.bf16.gmra.mxu0 %v531
        %v613 = vpop.f32.mrf.mxu0
        %v614 = vadd.f32 0.0, %v613
        %v615 = vpop.f32.mrf.mxu0
        %v616 = vpop.f32.mrf.mxu0
        %v617 = vadd.f32 0.0, %v616
        %v618 = vpop.f32.mrf.mxu0
        %619 = vmatprep.mubr.bf16.mxu0 0
        %620 = vmatmul.mubr.bf16.gmra.mxu0 %v534
        %v621 = vpop.f32.mrf.mxu0
        %v622 = vadd.f32 0.0, %v621
        %v623 = vpop.f32.mrf.mxu0
        %v624 = vpop.f32.mrf.mxu0
        %v625 = vadd.f32 0.0, %v624
        %v626 = vpop.f32.mrf.mxu0
        %627 = vmatprep.mubr.bf16.mxu0 0
        %628 = vmatmul.mubr.bf16.gmra.mxu0 %v537
        %v629 = vpop.f32.mrf.mxu0
        %v630 = vadd.f32 0.0, %v629
        %v631 = vpop.f32.mrf.mxu0
        %v632 = vpop.f32.mrf.mxu0
        %v633 = vadd.f32 0.0, %v632
        %v634 = vpop.f32.mrf.mxu0
        %635 = vdwg.mxu0
        %v652 = vunpack.c.l.b16 %v169
        %v653 = vunpack.c.l.b16 %v170
        %v654 = vunpack.c.l.b16 %v172
        %v655 = vunpack.c.l.b16 %v173
        %v656 = vunpack.c.l.b16 %v175
        %v657 = vunpack.c.l.b16 %v176
        %v658 = vunpack.c.l.b16 %v178
        %v659 = vunpack.c.l.b16 %v179
        %v660 = vunpack.c.l.b16 %v181
        %v661 = vunpack.c.l.b16 %v182
        %v662 = vunpack.c.l.b16 %v184
        %v663 = vunpack.c.l.b16 %v185
        %v664 = vunpack.c.l.b16 %v187
        %v665 = vunpack.c.l.b16 %v188
        %v666 = vunpack.c.l.b16 %v190
        %v667 = vunpack.c.l.b16 %v191
        %v668 = vpack.c.b16 %v653, %v652
        %v669 = vpack.c.b16 %v655, %v654
        %v670 = vpack.c.b16 %v657, %v656
        %v671 = vpack.c.b16 %v659, %v658
        %v672 = vpack.c.b16 %v661, %v660
        %v673 = vpack.c.b16 %v663, %v662
        %v674 = vpack.c.b16 %v665, %v664
        %v675 = vpack.c.b16 %v667, %v666
        %v684 = vunpack.c.l.b16 %v199
        %v685 = vunpack.c.l.b16 %v200
        %v686 = vunpack.c.l.b16 %v201
        %v687 = vunpack.c.l.b16 %v202
        %v688 = vunpack.c.l.b16 %v203
        %v689 = vunpack.c.l.b16 %v204
        %v690 = vunpack.c.l.b16 %v205
        %v691 = vunpack.c.l.b16 %v206
        %v692 = vpack.c.b16 %v685, %v684
        %v693 = vpack.c.b16 %v687, %v686
        %v694 = vpack.c.b16 %v689, %v688
        %v695 = vpack.c.b16 %v691, %v690
        %v701 = vsel %vm514, %v668, 0
        %v704 = vsel %vm514, %v669, 0
        %v707 = vsel %vm514, %v670, 0
        %v710 = vsel %vm514, %v671, 0
        %v713 = vsel %vm514, %v672, 0
        %v716 = vsel %vm514, %v673, 0
        %v719 = vsel %vm514, %v674, 0
        %v722 = vsel %vm514, %v675, 0
        %724 = vmatprep.subr.bf16.mxu0 0
        %725 = vmatpush1.bf16.msra.mxu0 0
        %726 = vmatprep.subr.bf16.mxu0 0
        %727 = vmatpush1.bf16.msra.mxu0 0
        %728 = vmatprep.subr.bf16.mxu0 0
        %729 = vmatpush1.bf16.msra.mxu0 0
        %730 = vmatprep.subr.bf16.mxu0 0
        %731 = vmatpush1.bf16.msra.mxu0 0
        %732 = vmatprep.subr.bf16.mxu0 0
        %733 = vmatpush1.bf16.msra.mxu0 %v695
        %734 = vmatprep.subr.bf16.mxu0 0
        %735 = vmatpush1.bf16.msra.mxu0 %v694
        %736 = vmatprep.subr.bf16.mxu0 0
        %737 = vmatpush1.bf16.msra.mxu0 %v693
        %738 = vmatprep.subr.bf16.mxu0 0
        %739 = vmatpush1.bf16.msra.mxu0 %v692
        %740 = vmatprep.subr.bf16.mxu0 0
        %741 = vmatpush2.bf16.msra.mxu0 0
        %742 = vmatprep.subr.bf16.mxu0 0
        %743 = vmatpush2.bf16.msra.mxu0 0
        %744 = vmatprep.subr.bf16.mxu0 0
        %745 = vmatpush2.bf16.msra.mxu0 0
        %746 = vmatprep.subr.bf16.mxu0 0
        %747 = vmatpush2.bf16.msra.mxu0 0
        %748 = vmatprep.subr.bf16.mxu0 0
        %749 = vmatpush2.bf16.msra.mxu0 0
        %750 = vmatprep.subr.bf16.mxu0 0
        %751 = vmatpush2.bf16.msra.mxu0 0
        %752 = vmatprep.subr.bf16.mxu0 0
        %753 = vmatpush2.bf16.msra.mxu0 0
        %754 = vmatprep.subr.bf16.mxu0 0
        %755 = vmatpush2.bf16.msra.mxu0 0
        %756 = vmatprep.mubr.bf16.mxu0 0
        %757 = vmatmul.mubr.bf16.gmra.mxu0 %v701
        %v758 = vpop.f32.mrf.mxu0
        %v759 = vadd.f32 %v574, %v758
        %v760 = vpop.f32.mrf.mxu0
        %v761 = vpop.f32.mrf.mxu0
        %v762 = vadd.f32 %v577, %v761
        %v763 = vpop.f32.mrf.mxu0
        %764 = vmatprep.mubr.bf16.mxu0 0
        %765 = vmatmul.mubr.bf16.gmra.mxu0 %v704
        %v766 = vpop.f32.mrf.mxu0
        %v767 = vadd.f32 %v582, %v766
        %v768 = vpop.f32.mrf.mxu0
        %v769 = vpop.f32.mrf.mxu0
        %v770 = vadd.f32 %v585, %v769
        %v771 = vpop.f32.mrf.mxu0
        %772 = vmatprep.mubr.bf16.mxu0 0
        %773 = vmatmul.mubr.bf16.gmra.mxu0 %v707
        %v774 = vpop.f32.mrf.mxu0
        %v775 = vadd.f32 %v590, %v774
        %v776 = vpop.f32.mrf.mxu0
        %v777 = vpop.f32.mrf.mxu0
        %v778 = vadd.f32 %v593, %v777
        %v779 = vpop.f32.mrf.mxu0
        %780 = vmatprep.mubr.bf16.mxu0 0
        %781 = vmatmul.mubr.bf16.gmra.mxu0 %v710
        %v782 = vpop.f32.mrf.mxu0
        %v783 = vadd.f32 %v598, %v782
        %v784 = vpop.f32.mrf.mxu0
        %v785 = vpop.f32.mrf.mxu0
        %v786 = vadd.f32 %v601, %v785
        %v787 = vpop.f32.mrf.mxu0
        %788 = vmatprep.mubr.bf16.mxu0 0
        %789 = vmatmul.mubr.bf16.gmra.mxu0 %v713
        %v790 = vpop.f32.mrf.mxu0
        %v791 = vadd.f32 %v606, %v790
        %v792 = vpop.f32.mrf.mxu0
        %v793 = vpop.f32.mrf.mxu0
        %v794 = vadd.f32 %v609, %v793
        %v795 = vpop.f32.mrf.mxu0
        %796 = vmatprep.mubr.bf16.mxu0 0
        %797 = vmatmul.mubr.bf16.gmra.mxu0 %v716
        %v798 = vpop.f32.mrf.mxu0
        %v799 = vadd.f32 %v614, %v798
        %v800 = vpop.f32.mrf.mxu0
        %v801 = vpop.f32.mrf.mxu0
        %v802 = vadd.f32 %v617, %v801
        %v803 = vpop.f32.mrf.mxu0
        %804 = vmatprep.mubr.bf16.mxu0 0
        %805 = vmatmul.mubr.bf16.gmra.mxu0 %v719
        %v806 = vpop.f32.mrf.mxu0
        %v807 = vadd.f32 %v622, %v806
        %v808 = vpop.f32.mrf.mxu0
        %v809 = vpop.f32.mrf.mxu0
        %v810 = vadd.f32 %v625, %v809
        %v811 = vpop.f32.mrf.mxu0
        %812 = vmatprep.mubr.bf16.mxu0 0
        %813 = vmatmul.mubr.bf16.gmra.mxu0 %v722
        %v814 = vpop.f32.mrf.mxu0
        %v815 = vadd.f32 %v630, %v814
        %v816 = vpop.f32.mrf.mxu0
        %v817 = vpop.f32.mrf.mxu0
        %v818 = vadd.f32 %v633, %v817
        %v819 = vpop.f32.mrf.mxu0
        %820 = vdwg.mxu0
        %vm829 = vcmask 1042432
        %vm830 = vcmask 1046532
        %vm831 = vmor %vm829, %vm830
        %v832 = vrot.slane %v169, 5
        %v833 = vrot.slane %v832, 4
        %v834 = vrot.slane %v170, 5
        %v835 = vsel %vm831, %v833, %v834
        %v836 = vrot.slane %v834, 4
        %v837 = vrot.slane %v171, 5
        %v838 = vsel %vm831, %v836, %v837
        %v839 = vrot.slane %v172, 5
        %v840 = vrot.slane %v839, 4
        %v841 = vrot.slane %v173, 5
        %v842 = vsel %vm831, %v840, %v841
        %v843 = vrot.slane %v841, 4
        %v844 = vrot.slane %v174, 5
        %v845 = vsel %vm831, %v843, %v844
        %v846 = vrot.slane %v175, 5
        %v847 = vrot.slane %v846, 4
        %v848 = vrot.slane %v176, 5
        %v849 = vsel %vm831, %v847, %v848
        %v850 = vrot.slane %v848, 4
        %v851 = vrot.slane %v177, 5
        %v852 = vsel %vm831, %v850, %v851
        %v853 = vrot.slane %v178, 5
        %v854 = vrot.slane %v853, 4
        %v855 = vrot.slane %v179, 5
        %v856 = vsel %vm831, %v854, %v855
        %v857 = vrot.slane %v855, 4
        %v858 = vrot.slane %v180, 5
        %v859 = vsel %vm831, %v857, %v858
        %v860 = vrot.slane %v181, 5
        %v861 = vrot.slane %v860, 4
        %v862 = vrot.slane %v182, 5
        %v863 = vsel %vm831, %v861, %v862
        %v864 = vrot.slane %v862, 4
        %v865 = vrot.slane %v183, 5
        %v866 = vsel %vm831, %v864, %v865
        %v867 = vrot.slane %v184, 5
        %v868 = vrot.slane %v867, 4
        %v869 = vrot.slane %v185, 5
        %v870 = vsel %vm831, %v868, %v869
        %v871 = vrot.slane %v869, 4
        %v872 = vrot.slane %v186, 5
        %v873 = vsel %vm831, %v871, %v872
        %v874 = vrot.slane %v187, 5
        %v875 = vrot.slane %v874, 4
        %v876 = vrot.slane %v188, 5
        %v877 = vsel %vm831, %v875, %v876
        %v878 = vrot.slane %v876, 4
        %v879 = vrot.slane %v189, 5
        %v880 = vsel %vm831, %v878, %v879
        %v881 = vrot.slane %v190, 5
        %v882 = vrot.slane %v881, 4
        %v883 = vrot.slane %v191, 5
        %v884 = vsel %vm831, %v882, %v883
        %v885 = vrot.slane %v883, 4
        %v886 = vrot.slane %v192, 5
        %v887 = vsel %vm831, %v885, %v886
        %v888 = vunpack.c.l.b16 %v835
        %v889 = vunpack.c.l.b16 %v838
        %v890 = vunpack.c.l.b16 %v842
        %v891 = vunpack.c.l.b16 %v845
        %v892 = vunpack.c.l.b16 %v849
        %v893 = vunpack.c.l.b16 %v852
        %v894 = vunpack.c.l.b16 %v856
        %v895 = vunpack.c.l.b16 %v859
        %v896 = vunpack.c.l.b16 %v863
        %v897 = vunpack.c.l.b16 %v866
        %v898 = vunpack.c.l.b16 %v870
        %v899 = vunpack.c.l.b16 %v873
        %v900 = vunpack.c.l.b16 %v877
        %v901 = vunpack.c.l.b16 %v880
        %v902 = vunpack.c.l.b16 %v884
        %v903 = vunpack.c.l.b16 %v887
        %v904 = vpack.c.b16 %v889, %v888
        %v905 = vpack.c.b16 %v891, %v890
        %v906 = vpack.c.b16 %v893, %v892
        %v907 = vpack.c.b16 %v895, %v894
        %v908 = vpack.c.b16 %v897, %v896
        %v909 = vpack.c.b16 %v899, %v898
        %v910 = vpack.c.b16 %v901, %v900
        %v911 = vpack.c.b16 %v903, %v902
        %v920 = vunpack.c.l.b16 %v215
        %v921 = vunpack.c.l.b16 %v216
        %v922 = vunpack.c.l.b16 %v217
        %v923 = vunpack.c.l.b16 %v218
        %v924 = vunpack.c.l.b16 %v219
        %v925 = vunpack.c.l.b16 %v220
        %v926 = vunpack.c.l.b16 %v221
        %v927 = vunpack.c.l.b16 %v222
        %v928 = vpack.c.b16 %v921, %v920
        %v929 = vpack.c.b16 %v923, %v922
        %v930 = vpack.c.b16 %v925, %v924
        %v931 = vpack.c.b16 %v927, %v926
        %v937 = vsel %vm514, %v904, 0
        %v940 = vsel %vm514, %v905, 0
        %v943 = vsel %vm514, %v906, 0
        %v946 = vsel %vm514, %v907, 0
        %v949 = vsel %vm514, %v908, 0
        %v952 = vsel %vm514, %v909, 0
        %v955 = vsel %vm514, %v910, 0
        %v958 = vsel %vm514, %v911, 0
        %960 = vmatprep.subr.bf16.mxu0 0
        %961 = vmatpush1.bf16.msra.mxu0 0
        %962 = vmatprep.subr.bf16.mxu0 0
        %963 = vmatpush1.bf16.msra.mxu0 0
        %964 = vmatprep.subr.bf16.mxu0 0
        %965 = vmatpush1.bf16.msra.mxu0 0
        %966 = vmatprep.subr.bf16.mxu0 0
        %967 = vmatpush1.bf16.msra.mxu0 0
        %968 = vmatprep.subr.bf16.mxu0 0
        %969 = vmatpush1.bf16.msra.mxu0 %v931
        %970 = vmatprep.subr.bf16.mxu0 0
        %971 = vmatpush1.bf16.msra.mxu0 %v930
        %972 = vmatprep.subr.bf16.mxu0 0
        %973 = vmatpush1.bf16.msra.mxu0 %v929
        %974 = vmatprep.subr.bf16.mxu0 0
        %975 = vmatpush1.bf16.msra.mxu0 %v928
        %976 = vmatprep.subr.bf16.mxu0 0
        %977 = vmatpush2.bf16.msra.mxu0 0
        %978 = vmatprep.subr.bf16.mxu0 0
        %979 = vmatpush2.bf16.msra.mxu0 0
        %980 = vmatprep.subr.bf16.mxu0 0
        %981 = vmatpush2.bf16.msra.mxu0 0
        %982 = vmatprep.subr.bf16.mxu0 0
        %983 = vmatpush2.bf16.msra.mxu0 0
        %984 = vmatprep.subr.bf16.mxu0 0
        %985 = vmatpush2.bf16.msra.mxu0 0
        %986 = vmatprep.subr.bf16.mxu0 0
        %987 = vmatpush2.bf16.msra.mxu0 0
        %988 = vmatprep.subr.bf16.mxu0 0
        %989 = vmatpush2.bf16.msra.mxu0 0
        %990 = vmatprep.subr.bf16.mxu0 0
        %991 = vmatpush2.bf16.msra.mxu0 0
        %992 = vmatprep.mubr.bf16.mxu0 0
        %993 = vmatmul.mubr.bf16.gmra.mxu0 %v937
        %v994 = vpop.f32.mrf.mxu0
        %v995 = vadd.f32 0.0, %v994
        %v996 = vpop.f32.mrf.mxu0
        %v997 = vpop.f32.mrf.mxu0
        %v998 = vadd.f32 0.0, %v997
        %v999 = vpop.f32.mrf.mxu0
        %1000 = vmatprep.mubr.bf16.mxu0 0
        %1001 = vmatmul.mubr.bf16.gmra.mxu0 %v940
        %v1002 = vpop.f32.mrf.mxu0
        %v1003 = vadd.f32 0.0, %v1002
        %v1004 = vpop.f32.mrf.mxu0
        %v1005 = vpop.f32.mrf.mxu0
        %v1006 = vadd.f32 0.0, %v1005
        %v1007 = vpop.f32.mrf.mxu0
        %1008 = vmatprep.mubr.bf16.mxu0 0
        %1009 = vmatmul.mubr.bf16.gmra.mxu0 %v943
        %v1010 = vpop.f32.mrf.mxu0
        %v1011 = vadd.f32 0.0, %v1010
        %v1012 = vpop.f32.mrf.mxu0
        %v1013 = vpop.f32.mrf.mxu0
        %v1014 = vadd.f32 0.0, %v1013
        %v1015 = vpop.f32.mrf.mxu0
        %1016 = vmatprep.mubr.bf16.mxu0 0
        %1017 = vmatmul.mubr.bf16.gmra.mxu0 %v946
        %v1018 = vpop.f32.mrf.mxu0
        %v1019 = vadd.f32 0.0, %v1018
        %v1020 = vpop.f32.mrf.mxu0
        %v1021 = vpop.f32.mrf.mxu0
        %v1022 = vadd.f32 0.0, %v1021
        %v1023 = vpop.f32.mrf.mxu0
        %1024 = vmatprep.mubr.bf16.mxu0 0
        %1025 = vmatmul.mubr.bf16.gmra.mxu0 %v949
        %v1026 = vpop.f32.mrf.mxu0
        %v1027 = vadd.f32 0.0, %v1026
        %v1028 = vpop.f32.mrf.mxu0
        %v1029 = vpop.f32.mrf.mxu0
        %v1030 = vadd.f32 0.0, %v1029
        %v1031 = vpop.f32.mrf.mxu0
        %1032 = vmatprep.mubr.bf16.mxu0 0
        %1033 = vmatmul.mubr.bf16.gmra.mxu0 %v952
        %v1034 = vpop.f32.mrf.mxu0
        %v1035 = vadd.f32 0.0, %v1034
        %v1036 = vpop.f32.mrf.mxu0
        %v1037 = vpop.f32.mrf.mxu0
        %v1038 = vadd.f32 0.0, %v1037
        %v1039 = vpop.f32.mrf.mxu0
        %1040 = vmatprep.mubr.bf16.mxu0 0
        %1041 = vmatmul.mubr.bf16.gmra.mxu0 %v955
        %v1042 = vpop.f32.mrf.mxu0
        %v1043 = vadd.f32 0.0, %v1042
        %v1044 = vpop.f32.mrf.mxu0
        %v1045 = vpop.f32.mrf.mxu0
        %v1046 = vadd.f32 0.0, %v1045
        %v1047 = vpop.f32.mrf.mxu0
        %1048 = vmatprep.mubr.bf16.mxu0 0
        %1049 = vmatmul.mubr.bf16.gmra.mxu0 %v958
        %v1050 = vpop.f32.mrf.mxu0
        %v1051 = vadd.f32 0.0, %v1050
        %v1052 = vpop.f32.mrf.mxu0
        %v1053 = vpop.f32.mrf.mxu0
        %v1054 = vadd.f32 0.0, %v1053
        %v1055 = vpop.f32.mrf.mxu0
        %1056 = vdwg.mxu0
        %v1057 = vadd.f32 %v759, %v995
        %v1058 = vadd.f32 %v762, %v998
        %v1059 = vadd.f32 %v767, %v1003
        %v1060 = vadd.f32 %v770, %v1006
        %v1061 = vadd.f32 %v775, %v1011
        %v1062 = vadd.f32 %v778, %v1014
        %v1063 = vadd.f32 %v783, %v1019
        %v1064 = vadd.f32 %v786, %v1022
        %v1065 = vadd.f32 %v791, %v1027
        %v1066 = vadd.f32 %v794, %v1030
        %v1067 = vadd.f32 %v799, %v1035
        %v1068 = vadd.f32 %v802, %v1038
        %v1069 = vadd.f32 %v807, %v1043
        %v1070 = vadd.f32 %v810, %v1046
        %v1071 = vadd.f32 %v815, %v1051
        %v1072 = vadd.f32 %v818, %v1054
        %v1075 = vunpack.c.l.b16 %v193
        %v1076 = vunpack.c.l.b16 %v194
        %v1077 = vpack.c.b16 %v1076, %v1075
        %v1086 = vunpack.c.l.b16 %v223
        %v1087 = vunpack.c.l.b16 %v224
        %v1088 = vunpack.c.l.b16 %v225
        %v1089 = vunpack.c.l.b16 %v226
        %v1090 = vunpack.c.l.b16 %v227
        %v1091 = vunpack.c.l.b16 %v228
        %v1092 = vunpack.c.l.b16 %v229
        %v1093 = vunpack.c.l.b16 %v230
        %v1094 = vpack.c.b16 %v1087, %v1086
        %v1095 = vpack.c.b16 %v1089, %v1088
        %v1096 = vpack.c.b16 %v1091, %v1090
        %v1097 = vpack.c.b16 %v1093, %v1092
        %v1103 = vsel %vm514, %v1077, 0
        %1105 = vmatprep.subr.bf16.mxu0 0
        %1106 = vmatpush1.bf16.msra.mxu0 0
        %1107 = vmatprep.subr.bf16.mxu0 0
        %1108 = vmatpush1.bf16.msra.mxu0 0
        %1109 = vmatprep.subr.bf16.mxu0 0
        %1110 = vmatpush1.bf16.msra.mxu0 0
        %1111 = vmatprep.subr.bf16.mxu0 0
        %1112 = vmatpush1.bf16.msra.mxu0 0
        %1113 = vmatprep.subr.bf16.mxu0 0
        %1114 = vmatpush1.bf16.msra.mxu0 %v1097
        %1115 = vmatprep.subr.bf16.mxu0 0
        %1116 = vmatpush1.bf16.msra.mxu0 %v1096
        %1117 = vmatprep.subr.bf16.mxu0 0
        %1118 = vmatpush1.bf16.msra.mxu0 %v1095
        %1119 = vmatprep.subr.bf16.mxu0 0
        %1120 = vmatpush1.bf16.msra.mxu0 %v1094
        %1121 = vmatprep.subr.bf16.mxu0 0
        %1122 = vmatpush2.bf16.msra.mxu0 0
        %1123 = vmatprep.subr.bf16.mxu0 0
        %1124 = vmatpush2.bf16.msra.mxu0 0
        %1125 = vmatprep.subr.bf16.mxu0 0
        %1126 = vmatpush2.bf16.msra.mxu0 0
        %1127 = vmatprep.subr.bf16.mxu0 0
        %1128 = vmatpush2.bf16.msra.mxu0 0
        %1129 = vmatprep.subr.bf16.mxu0 0
        %1130 = vmatpush2.bf16.msra.mxu0 0
        %1131 = vmatprep.subr.bf16.mxu0 0
        %1132 = vmatpush2.bf16.msra.mxu0 0
        %1133 = vmatprep.subr.bf16.mxu0 0
        %1134 = vmatpush2.bf16.msra.mxu0 0
        %1135 = vmatprep.subr.bf16.mxu0 0
        %1136 = vmatpush2.bf16.msra.mxu0 0
        %1137 = vmatprep.mubr.bf16.mxu0 0
        %1138 = vmatmul.mubr.bf16.gmra.mxu0 %v704
        %v1139 = vpop.f32.mrf.mxu0
        %v1140 = vadd.f32 0.0, %v1139
        %v1141 = vpop.f32.mrf.mxu0
        %v1142 = vpop.f32.mrf.mxu0
        %v1143 = vadd.f32 0.0, %v1142
        %v1144 = vpop.f32.mrf.mxu0
        %1145 = vmatprep.mubr.bf16.mxu0 0
        %1146 = vmatmul.mubr.bf16.gmra.mxu0 %v707
        %v1147 = vpop.f32.mrf.mxu0
        %v1148 = vadd.f32 0.0, %v1147
        %v1149 = vpop.f32.mrf.mxu0
        %v1150 = vpop.f32.mrf.mxu0
        %v1151 = vadd.f32 0.0, %v1150
        %v1152 = vpop.f32.mrf.mxu0
        %1153 = vmatprep.mubr.bf16.mxu0 0
        %1154 = vmatmul.mubr.bf16.gmra.mxu0 %v710
        %v1155 = vpop.f32.mrf.mxu0
        %v1156 = vadd.f32 0.0, %v1155
        %v1157 = vpop.f32.mrf.mxu0
        %v1158 = vpop.f32.mrf.mxu0
        %v1159 = vadd.f32 0.0, %v1158
        %v1160 = vpop.f32.mrf.mxu0
        %1161 = vmatprep.mubr.bf16.mxu0 0
        %1162 = vmatmul.mubr.bf16.gmra.mxu0 %v713
        %v1163 = vpop.f32.mrf.mxu0
        %v1164 = vadd.f32 0.0, %v1163
        %v1165 = vpop.f32.mrf.mxu0
        %v1166 = vpop.f32.mrf.mxu0
        %v1167 = vadd.f32 0.0, %v1166
        %v1168 = vpop.f32.mrf.mxu0
        %1169 = vmatprep.mubr.bf16.mxu0 0
        %1170 = vmatmul.mubr.bf16.gmra.mxu0 %v716
        %v1171 = vpop.f32.mrf.mxu0
        %v1172 = vadd.f32 0.0, %v1171
        %v1173 = vpop.f32.mrf.mxu0
        %v1174 = vpop.f32.mrf.mxu0
        %v1175 = vadd.f32 0.0, %v1174
        %v1176 = vpop.f32.mrf.mxu0
        %1177 = vmatprep.mubr.bf16.mxu0 0
        %1178 = vmatmul.mubr.bf16.gmra.mxu0 %v719
        %v1179 = vpop.f32.mrf.mxu0
        %v1180 = vadd.f32 0.0, %v1179
        %v1181 = vpop.f32.mrf.mxu0
        %v1182 = vpop.f32.mrf.mxu0
        %v1183 = vadd.f32 0.0, %v1182
        %v1184 = vpop.f32.mrf.mxu0
        %1185 = vmatprep.mubr.bf16.mxu0 0
        %1186 = vmatmul.mubr.bf16.gmra.mxu0 %v722
        %v1187 = vpop.f32.mrf.mxu0
        %v1188 = vadd.f32 0.0, %v1187
        %v1189 = vpop.f32.mrf.mxu0
        %v1190 = vpop.f32.mrf.mxu0
        %v1191 = vadd.f32 0.0, %v1190
        %v1192 = vpop.f32.mrf.mxu0
        %1193 = vmatprep.mubr.bf16.mxu0 0
        %1194 = vmatmul.mubr.bf16.gmra.mxu0 %v1103
        %v1195 = vpop.f32.mrf.mxu0
        %v1196 = vadd.f32 0.0, %v1195
        %v1197 = vpop.f32.mrf.mxu0
        %v1198 = vpop.f32.mrf.mxu0
        %v1199 = vadd.f32 0.0, %v1198
        %v1200 = vpop.f32.mrf.mxu0
        %1201 = vdwg.mxu0
        %v1202 = vadd.f32 %v1057, %v1140
        %v1203 = vadd.f32 %v1058, %v1143
        %v1204 = vadd.f32 %v1059, %v1148
        %v1205 = vadd.f32 %v1060, %v1151
        %v1206 = vadd.f32 %v1061, %v1156
        %v1207 = vadd.f32 %v1062, %v1159
        %v1208 = vadd.f32 %v1063, %v1164
        %v1209 = vadd.f32 %v1064, %v1167
        %v1210 = vadd.f32 %v1065, %v1172
        %v1211 = vadd.f32 %v1066, %v1175
        %v1212 = vadd.f32 %v1067, %v1180
        %v1213 = vadd.f32 %v1068, %v1183
        %v1214 = vadd.f32 %v1069, %v1188
        %v1215 = vadd.f32 %v1070, %v1191
        %v1216 = vadd.f32 %v1071, %v1196
        %v1217 = vadd.f32 %v1072, %v1199
        %v1219 = vshrl.u32 %v193, 16
        %v1221 = vrot.slane %v1219, 4
        %v1222 = vshll.u32 %v193, 16
        %v1224 = vrot.slane %v1222, 5
        %v1225 = vor.u32 %v1221, %v1224
        %v1226 = vrot.slane %v1225, 4
        %v1228 = vshll.u32 %v194, 16
        %v1230 = vrot.slane %v1228, 5
        %v1231 = vsel %vm273, %v1226, %v1230
        %v1232 = vshrl.u32 %v194, 16
        %v1234 = vrot.slane %v1232, 4
        %v1235 = vor.u32 %v1234, %v1230
        %v1236 = vrot.slane %v1235, 4
        %v1238 = vshll.u32 %v195, 16
        %v1240 = vrot.slane %v1238, 5
        %v1241 = vsel %vm273, %v1236, %v1240
        %v1242 = vunpack.c.l.b16 %v1231
        %v1243 = vunpack.c.l.b16 %v1241
        %v1244 = vpack.c.b16 %v1243, %v1242
        %v1253 = vunpack.c.l.b16 %v231
        %v1254 = vunpack.c.l.b16 %v232
        %v1255 = vunpack.c.l.b16 %v233
        %v1256 = vunpack.c.l.b16 %v234
        %v1257 = vunpack.c.l.b16 %v235
        %v1258 = vunpack.c.l.b16 %v236
        %v1259 = vunpack.c.l.b16 %v237
        %v1260 = vunpack.c.l.b16 %v238
        %v1261 = vpack.c.b16 %v1254, %v1253
        %v1262 = vpack.c.b16 %v1256, %v1255
        %v1263 = vpack.c.b16 %v1258, %v1257
        %v1264 = vpack.c.b16 %v1260, %v1259
        %v1270 = vsel %vm514, %v1244, 0
        %1272 = vmatprep.subr.bf16.mxu0 0
        %1273 = vmatpush1.bf16.msra.mxu0 0
        %1274 = vmatprep.subr.bf16.mxu0 0
        %1275 = vmatpush1.bf16.msra.mxu0 0
        %1276 = vmatprep.subr.bf16.mxu0 0
        %1277 = vmatpush1.bf16.msra.mxu0 0
        %1278 = vmatprep.subr.bf16.mxu0 0
        %1279 = vmatpush1.bf16.msra.mxu0 0
        %1280 = vmatprep.subr.bf16.mxu0 0
        %1281 = vmatpush1.bf16.msra.mxu0 %v1264
        %1282 = vmatprep.subr.bf16.mxu0 0
        %1283 = vmatpush1.bf16.msra.mxu0 %v1263
        %1284 = vmatprep.subr.bf16.mxu0 0
        %1285 = vmatpush1.bf16.msra.mxu0 %v1262
        %1286 = vmatprep.subr.bf16.mxu0 0
        %1287 = vmatpush1.bf16.msra.mxu0 %v1261
        %1288 = vmatprep.subr.bf16.mxu0 0
        %1289 = vmatpush2.bf16.msra.mxu0 0
        %1290 = vmatprep.subr.bf16.mxu0 0
        %1291 = vmatpush2.bf16.msra.mxu0 0
        %1292 = vmatprep.subr.bf16.mxu0 0
        %1293 = vmatpush2.bf16.msra.mxu0 0
        %1294 = vmatprep.subr.bf16.mxu0 0
        %1295 = vmatpush2.bf16.msra.mxu0 0
        %1296 = vmatprep.subr.bf16.mxu0 0
        %1297 = vmatpush2.bf16.msra.mxu0 0
        %1298 = vmatprep.subr.bf16.mxu0 0
        %1299 = vmatpush2.bf16.msra.mxu0 0
        %1300 = vmatprep.subr.bf16.mxu0 0
        %1301 = vmatpush2.bf16.msra.mxu0 0
        %1302 = vmatprep.subr.bf16.mxu0 0
        %1303 = vmatpush2.bf16.msra.mxu0 0
        %1304 = vmatprep.mubr.bf16.mxu0 0
        %1305 = vmatmul.mubr.bf16.gmra.mxu0 %v519
        %v1306 = vpop.f32.mrf.mxu0
        %v1307 = vadd.f32 0.0, %v1306
        %v1308 = vpop.f32.mrf.mxu0
        %v1309 = vpop.f32.mrf.mxu0
        %v1310 = vadd.f32 0.0, %v1309
        %v1311 = vpop.f32.mrf.mxu0
        %1312 = vmatprep.mubr.bf16.mxu0 0
        %1313 = vmatmul.mubr.bf16.gmra.mxu0 %v522
        %v1314 = vpop.f32.mrf.mxu0
        %v1315 = vadd.f32 0.0, %v1314
        %v1316 = vpop.f32.mrf.mxu0
        %v1317 = vpop.f32.mrf.mxu0
        %v1318 = vadd.f32 0.0, %v1317
        %v1319 = vpop.f32.mrf.mxu0
        %1320 = vmatprep.mubr.bf16.mxu0 0
        %1321 = vmatmul.mubr.bf16.gmra.mxu0 %v525
        %v1322 = vpop.f32.mrf.mxu0
        %v1323 = vadd.f32 0.0, %v1322
        %v1324 = vpop.f32.mrf.mxu0
        %v1325 = vpop.f32.mrf.mxu0
        %v1326 = vadd.f32 0.0, %v1325
        %v1327 = vpop.f32.mrf.mxu0
        %1328 = vmatprep.mubr.bf16.mxu0 0
        %1329 = vmatmul.mubr.bf16.gmra.mxu0 %v528
        %v1330 = vpop.f32.mrf.mxu0
        %v1331 = vadd.f32 0.0, %v1330
        %v1332 = vpop.f32.mrf.mxu0
        %v1333 = vpop.f32.mrf.mxu0
        %v1334 = vadd.f32 0.0, %v1333
        %v1335 = vpop.f32.mrf.mxu0
        %1336 = vmatprep.mubr.bf16.mxu0 0
        %1337 = vmatmul.mubr.bf16.gmra.mxu0 %v531
        %v1338 = vpop.f32.mrf.mxu0
        %v1339 = vadd.f32 0.0, %v1338
        %v1340 = vpop.f32.mrf.mxu0
        %v1341 = vpop.f32.mrf.mxu0
        %v1342 = vadd.f32 0.0, %v1341
        %v1343 = vpop.f32.mrf.mxu0
        %1344 = vmatprep.mubr.bf16.mxu0 0
        %1345 = vmatmul.mubr.bf16.gmra.mxu0 %v534
        %v1346 = vpop.f32.mrf.mxu0
        %v1347 = vadd.f32 0.0, %v1346
        %v1348 = vpop.f32.mrf.mxu0
        %v1349 = vpop.f32.mrf.mxu0
        %v1350 = vadd.f32 0.0, %v1349
        %v1351 = vpop.f32.mrf.mxu0
        %1352 = vmatprep.mubr.bf16.mxu0 0
        %1353 = vmatmul.mubr.bf16.gmra.mxu0 %v537
        %v1354 = vpop.f32.mrf.mxu0
        %v1355 = vadd.f32 0.0, %v1354
        %v1356 = vpop.f32.mrf.mxu0
        %v1357 = vpop.f32.mrf.mxu0
        %v1358 = vadd.f32 0.0, %v1357
        %v1359 = vpop.f32.mrf.mxu0
        %1360 = vmatprep.mubr.bf16.mxu0 0
        %1361 = vmatmul.mubr.bf16.gmra.mxu0 %v1270
        %v1362 = vpop.f32.mrf.mxu0
        %v1363 = vadd.f32 0.0, %v1362
        %v1364 = vpop.f32.mrf.mxu0
        %v1365 = vpop.f32.mrf.mxu0
        %v1366 = vadd.f32 0.0, %v1365
        %v1367 = vpop.f32.mrf.mxu0
        %1368 = vdwg.mxu0
        %v1369 = vadd.f32 %v1202, %v1307
        %v1370 = vadd.f32 %v1203, %v1310
        %v1371 = vadd.f32 %v1204, %v1315
        %v1372 = vadd.f32 %v1205, %v1318
        %v1373 = vadd.f32 %v1206, %v1323
        %v1374 = vadd.f32 %v1207, %v1326
        %v1375 = vadd.f32 %v1208, %v1331
        %v1376 = vadd.f32 %v1209, %v1334
        %v1377 = vadd.f32 %v1210, %v1339
        %v1378 = vadd.f32 %v1211, %v1342
        %v1379 = vadd.f32 %v1212, %v1347
        %v1380 = vadd.f32 %v1213, %v1350
        %v1381 = vadd.f32 %v1214, %v1355
        %v1382 = vadd.f32 %v1215, %v1358
        %v1383 = vadd.f32 %v1216, %v1363
        %v1384 = vadd.f32 %v1217, %v1366
        %v1386 = vrot.slane %v193, 5
        %v1387 = vrot.slane %v1386, 4
        %v1388 = vrot.slane %v194, 5
        %v1389 = vsel %vm831, %v1387, %v1388
        %v1390 = vrot.slane %v1388, 4
        %v1391 = vrot.slane %v195, 5
        %v1392 = vsel %vm831, %v1390, %v1391
        %v1393 = vunpack.c.l.b16 %v1389
        %v1394 = vunpack.c.l.b16 %v1392
        %v1395 = vpack.c.b16 %v1394, %v1393
        %v1404 = vunpack.c.l.b16 %v239
        %v1405 = vunpack.c.l.b16 %v240
        %v1406 = vunpack.c.l.b16 %v241
        %v1407 = vunpack.c.l.b16 %v242
        %v1408 = vunpack.c.l.b16 %v243
        %v1409 = vunpack.c.l.b16 %v244
        %v1410 = vunpack.c.l.b16 %v245
        %v1411 = vunpack.c.l.b16 %v246
        %v1412 = vpack.c.b16 %v1405, %v1404
        %v1413 = vpack.c.b16 %v1407, %v1406
        %v1414 = vpack.c.b16 %v1409, %v1408
        %v1415 = vpack.c.b16 %v1411, %v1410
        %v1421 = vsel %vm514, %v1395, 0
        %1423 = vmatprep.subr.bf16.mxu0 0
        %1424 = vmatpush1.bf16.msra.mxu0 0
        %1425 = vmatprep.subr.bf16.mxu0 0
        %1426 = vmatpush1.bf16.msra.mxu0 0
        %1427 = vmatprep.subr.bf16.mxu0 0
        %1428 = vmatpush1.bf16.msra.mxu0 0
        %1429 = vmatprep.subr.bf16.mxu0 0
        %1430 = vmatpush1.bf16.msra.mxu0 0
        %1431 = vmatprep.subr.bf16.mxu0 0
        %1432 = vmatpush1.bf16.msra.mxu0 %v1415
        %1433 = vmatprep.subr.bf16.mxu0 0
        %1434 = vmatpush1.bf16.msra.mxu0 %v1414
        %1435 = vmatprep.subr.bf16.mxu0 0
        %1436 = vmatpush1.bf16.msra.mxu0 %v1413
        %1437 = vmatprep.subr.bf16.mxu0 0
        %1438 = vmatpush1.bf16.msra.mxu0 %v1412
        %1439 = vmatprep.subr.bf16.mxu0 0
        %1440 = vmatpush2.bf16.msra.mxu0 0
        %1441 = vmatprep.subr.bf16.mxu0 0
        %1442 = vmatpush2.bf16.msra.mxu0 0
        %1443 = vmatprep.subr.bf16.mxu0 0
        %1444 = vmatpush2.bf16.msra.mxu0 0
        %1445 = vmatprep.subr.bf16.mxu0 0
        %1446 = vmatpush2.bf16.msra.mxu0 0
        %1447 = vmatprep.subr.bf16.mxu0 0
        %1448 = vmatpush2.bf16.msra.mxu0 0
        %1449 = vmatprep.subr.bf16.mxu0 0
        %1450 = vmatpush2.bf16.msra.mxu0 0
        %1451 = vmatprep.subr.bf16.mxu0 0
        %1452 = vmatpush2.bf16.msra.mxu0 0
        %1453 = vmatprep.subr.bf16.mxu0 0
        %1454 = vmatpush2.bf16.msra.mxu0 0
        %1455 = vmatprep.mubr.bf16.mxu0 0
        %1456 = vmatmul.mubr.bf16.gmra.mxu0 %v940
        %v1457 = vpop.f32.mrf.mxu0
        %v1458 = vadd.f32 0.0, %v1457
        %v1459 = vpop.f32.mrf.mxu0
        %v1460 = vpop.f32.mrf.mxu0
        %v1461 = vadd.f32 0.0, %v1460
        %v1462 = vpop.f32.mrf.mxu0
        %1463 = vmatprep.mubr.bf16.mxu0 0
        %1464 = vmatmul.mubr.bf16.gmra.mxu0 %v943
        %v1465 = vpop.f32.mrf.mxu0
        %v1466 = vadd.f32 0.0, %v1465
        %v1467 = vpop.f32.mrf.mxu0
        %v1468 = vpop.f32.mrf.mxu0
        %v1469 = vadd.f32 0.0, %v1468
        %v1470 = vpop.f32.mrf.mxu0
        %1471 = vmatprep.mubr.bf16.mxu0 0
        %1472 = vmatmul.mubr.bf16.gmra.mxu0 %v946
        %v1473 = vpop.f32.mrf.mxu0
        %v1474 = vadd.f32 0.0, %v1473
        %v1475 = vpop.f32.mrf.mxu0
        %v1476 = vpop.f32.mrf.mxu0
        %v1477 = vadd.f32 0.0, %v1476
        %v1478 = vpop.f32.mrf.mxu0
        %1479 = vmatprep.mubr.bf16.mxu0 0
        %1480 = vmatmul.mubr.bf16.gmra.mxu0 %v949
        %v1481 = vpop.f32.mrf.mxu0
        %v1482 = vadd.f32 0.0, %v1481
        %v1483 = vpop.f32.mrf.mxu0
        %v1484 = vpop.f32.mrf.mxu0
        %v1485 = vadd.f32 0.0, %v1484
        %v1486 = vpop.f32.mrf.mxu0
        %1487 = vmatprep.mubr.bf16.mxu0 0
        %1488 = vmatmul.mubr.bf16.gmra.mxu0 %v952
        %v1489 = vpop.f32.mrf.mxu0
        %v1490 = vadd.f32 0.0, %v1489
        %v1491 = vpop.f32.mrf.mxu0
        %v1492 = vpop.f32.mrf.mxu0
        %v1493 = vadd.f32 0.0, %v1492
        %v1494 = vpop.f32.mrf.mxu0
        %1495 = vmatprep.mubr.bf16.mxu0 0
        %1496 = vmatmul.mubr.bf16.gmra.mxu0 %v955
        %v1497 = vpop.f32.mrf.mxu0
        %v1498 = vadd.f32 0.0, %v1497
        %v1499 = vpop.f32.mrf.mxu0
        %v1500 = vpop.f32.mrf.mxu0
        %v1501 = vadd.f32 0.0, %v1500
        %v1502 = vpop.f32.mrf.mxu0
        %1503 = vmatprep.mubr.bf16.mxu0 0
        %1504 = vmatmul.mubr.bf16.gmra.mxu0 %v958
        %v1505 = vpop.f32.mrf.mxu0
        %v1506 = vadd.f32 0.0, %v1505
        %v1507 = vpop.f32.mrf.mxu0
        %v1508 = vpop.f32.mrf.mxu0
        %v1509 = vadd.f32 0.0, %v1508
        %v1510 = vpop.f32.mrf.mxu0
        %1511 = vmatprep.mubr.bf16.mxu0 0
        %1512 = vmatmul.mubr.bf16.gmra.mxu0 %v1421
        %v1513 = vpop.f32.mrf.mxu0
        %v1514 = vadd.f32 0.0, %v1513
        %v1515 = vpop.f32.mrf.mxu0
        %v1516 = vpop.f32.mrf.mxu0
        %v1517 = vadd.f32 0.0, %v1516
        %v1518 = vpop.f32.mrf.mxu0
        %1519 = vdwg.mxu0
        %v1520 = vadd.f32 %v1369, %v1458
        %v1521 = vadd.f32 %v1370, %v1461
        %v1522 = vadd.f32 %v1371, %v1466
        %v1523 = vadd.f32 %v1372, %v1469
        %v1524 = vadd.f32 %v1373, %v1474
        %v1525 = vadd.f32 %v1374, %v1477
        %v1526 = vadd.f32 %v1375, %v1482
        %v1527 = vadd.f32 %v1376, %v1485
        %v1528 = vadd.f32 %v1377, %v1490
        %v1529 = vadd.f32 %v1378, %v1493
        %v1530 = vadd.f32 %v1379, %v1498
        %v1531 = vadd.f32 %v1380, %v1501
        %v1532 = vadd.f32 %v1381, %v1506
        %v1533 = vadd.f32 %v1382, %v1509
        %v1534 = vadd.f32 %v1383, %v1514
        %v1535 = vadd.f32 %v1384, %v1517
        %v1538 = vunpack.c.l.b16 %v196
        %v1539 = vunpack.c.l.b16 %v197
        %v1540 = vpack.c.b16 %v1539, %v1538
        %v1549 = vunpack.c.l.b16 %v247
        %v1550 = vunpack.c.l.b16 %v248
        %v1551 = vunpack.c.l.b16 %v249
        %v1552 = vunpack.c.l.b16 %v250
        %v1553 = vunpack.c.l.b16 %v251
        %v1554 = vunpack.c.l.b16 %v252
        %v1555 = vunpack.c.l.b16 %v253
        %v1556 = vunpack.c.l.b16 %v254
        %v1557 = vpack.c.b16 %v1550, %v1549
        %v1558 = vpack.c.b16 %v1552, %v1551
        %v1559 = vpack.c.b16 %v1554, %v1553
        %v1560 = vpack.c.b16 %v1556, %v1555
        %v1566 = vsel %vm514, %v1540, 0
        %1568 = vmatprep.subr.bf16.mxu0 0
        %1569 = vmatpush1.bf16.msra.mxu0 0
        %1570 = vmatprep.subr.bf16.mxu0 0
        %1571 = vmatpush1.bf16.msra.mxu0 0
        %1572 = vmatprep.subr.bf16.mxu0 0
        %1573 = vmatpush1.bf16.msra.mxu0 0
        %1574 = vmatprep.subr.bf16.mxu0 0
        %1575 = vmatpush1.bf16.msra.mxu0 0
        %1576 = vmatprep.subr.bf16.mxu0 0
        %1577 = vmatpush1.bf16.msra.mxu0 %v1560
        %1578 = vmatprep.subr.bf16.mxu0 0
        %1579 = vmatpush1.bf16.msra.mxu0 %v1559
        %1580 = vmatprep.subr.bf16.mxu0 0
        %1581 = vmatpush1.bf16.msra.mxu0 %v1558
        %1582 = vmatprep.subr.bf16.mxu0 0
        %1583 = vmatpush1.bf16.msra.mxu0 %v1557
        %1584 = vmatprep.subr.bf16.mxu0 0
        %1585 = vmatpush2.bf16.msra.mxu0 0
        %1586 = vmatprep.subr.bf16.mxu0 0
        %1587 = vmatpush2.bf16.msra.mxu0 0
        %1588 = vmatprep.subr.bf16.mxu0 0
        %1589 = vmatpush2.bf16.msra.mxu0 0
        %1590 = vmatprep.subr.bf16.mxu0 0
        %1591 = vmatpush2.bf16.msra.mxu0 0
        %1592 = vmatprep.subr.bf16.mxu0 0
        %1593 = vmatpush2.bf16.msra.mxu0 0
        %1594 = vmatprep.subr.bf16.mxu0 0
        %1595 = vmatpush2.bf16.msra.mxu0 0
        %1596 = vmatprep.subr.bf16.mxu0 0
        %1597 = vmatpush2.bf16.msra.mxu0 0
        %1598 = vmatprep.subr.bf16.mxu0 0
        %1599 = vmatpush2.bf16.msra.mxu0 0
        %1600 = vmatprep.mubr.bf16.mxu0 0
        %1601 = vmatmul.mubr.bf16.gmra.mxu0 %v707
        %v1602 = vpop.f32.mrf.mxu0
        %v1603 = vadd.f32 0.0, %v1602
        %v1604 = vpop.f32.mrf.mxu0
        %v1605 = vpop.f32.mrf.mxu0
        %v1606 = vadd.f32 0.0, %v1605
        %v1607 = vpop.f32.mrf.mxu0
        %1608 = vmatprep.mubr.bf16.mxu0 0
        %1609 = vmatmul.mubr.bf16.gmra.mxu0 %v710
        %v1610 = vpop.f32.mrf.mxu0
        %v1611 = vadd.f32 0.0, %v1610
        %v1612 = vpop.f32.mrf.mxu0
        %v1613 = vpop.f32.mrf.mxu0
        %v1614 = vadd.f32 0.0, %v1613
        %v1615 = vpop.f32.mrf.mxu0
        %1616 = vmatprep.mubr.bf16.mxu0 0
        %1617 = vmatmul.mubr.bf16.gmra.mxu0 %v713
        %v1618 = vpop.f32.mrf.mxu0
        %v1619 = vadd.f32 0.0, %v1618
        %v1620 = vpop.f32.mrf.mxu0
        %v1621 = vpop.f32.mrf.mxu0
        %v1622 = vadd.f32 0.0, %v1621
        %v1623 = vpop.f32.mrf.mxu0
        %1624 = vmatprep.mubr.bf16.mxu0 0
        %1625 = vmatmul.mubr.bf16.gmra.mxu0 %v716
        %v1626 = vpop.f32.mrf.mxu0
        %v1627 = vadd.f32 0.0, %v1626
        %v1628 = vpop.f32.mrf.mxu0
        %v1629 = vpop.f32.mrf.mxu0
        %v1630 = vadd.f32 0.0, %v1629
        %v1631 = vpop.f32.mrf.mxu0
        %1632 = vmatprep.mubr.bf16.mxu0 0
        %1633 = vmatmul.mubr.bf16.gmra.mxu0 %v719
        %v1634 = vpop.f32.mrf.mxu0
        %v1635 = vadd.f32 0.0, %v1634
        %v1636 = vpop.f32.mrf.mxu0
        %v1637 = vpop.f32.mrf.mxu0
        %v1638 = vadd.f32 0.0, %v1637
        %v1639 = vpop.f32.mrf.mxu0
        %1640 = vmatprep.mubr.bf16.mxu0 0
        %1641 = vmatmul.mubr.bf16.gmra.mxu0 %v722
        %v1642 = vpop.f32.mrf.mxu0
        %v1643 = vadd.f32 0.0, %v1642
        %v1644 = vpop.f32.mrf.mxu0
        %v1645 = vpop.f32.mrf.mxu0
        %v1646 = vadd.f32 0.0, %v1645
        %v1647 = vpop.f32.mrf.mxu0
        %1648 = vmatprep.mubr.bf16.mxu0 0
        %1649 = vmatmul.mubr.bf16.gmra.mxu0 %v1103
        %v1650 = vpop.f32.mrf.mxu0
        %v1651 = vadd.f32 0.0, %v1650
        %v1652 = vpop.f32.mrf.mxu0
        %v1653 = vpop.f32.mrf.mxu0
        %v1654 = vadd.f32 0.0, %v1653
        %v1655 = vpop.f32.mrf.mxu0
        %1656 = vmatprep.mubr.bf16.mxu0 0
        %1657 = vmatmul.mubr.bf16.gmra.mxu0 %v1566
        %v1658 = vpop.f32.mrf.mxu0
        %v1659 = vadd.f32 0.0, %v1658
        %v1660 = vpop.f32.mrf.mxu0
        %v1661 = vpop.f32.mrf.mxu0
        %v1662 = vadd.f32 0.0, %v1661
        %v1663 = vpop.f32.mrf.mxu0
        %1664 = vdwg.mxu0
        %v1665 = vadd.f32 %v1520, %v1603
        %v1666 = vadd.f32 %v1521, %v1606
        %v1667 = vadd.f32 %v1522, %v1611
        %v1668 = vadd.f32 %v1523, %v1614
        %v1669 = vadd.f32 %v1524, %v1619
        %v1670 = vadd.f32 %v1525, %v1622
        %v1671 = vadd.f32 %v1526, %v1627
        %v1672 = vadd.f32 %v1527, %v1630
        %v1673 = vadd.f32 %v1528, %v1635
        %v1674 = vadd.f32 %v1529, %v1638
        %v1675 = vadd.f32 %v1530, %v1643
        %v1676 = vadd.f32 %v1531, %v1646
        %v1677 = vadd.f32 %v1532, %v1651
        %v1678 = vadd.f32 %v1533, %v1654
        %v1679 = vadd.f32 %v1534, %v1659
        %v1680 = vadd.f32 %v1535, %v1662
        %v1682 = vshrl.u32 %v196, 16
        %v1684 = vrot.slane %v1682, 4
        %v1685 = vshll.u32 %v196, 16
        %v1687 = vrot.slane %v1685, 5
        %v1688 = vor.u32 %v1684, %v1687
        %v1689 = vrot.slane %v1688, 4
        %v1691 = vshll.u32 %v197, 16
        %v1693 = vrot.slane %v1691, 5
        %v1694 = vsel %vm273, %v1689, %v1693
        %v1695 = vshrl.u32 %v197, 16
        %v1697 = vrot.slane %v1695, 4
        %v1698 = vor.u32 %v1697, %v1693
        %v1699 = vrot.slane %v1698, 4
        %v1701 = vshll.u32 %v198, 16
        %v1703 = vrot.slane %v1701, 5
        %v1704 = vsel %vm273, %v1699, %v1703
        %v1705 = vunpack.c.l.b16 %v1694
        %v1706 = vunpack.c.l.b16 %v1704
        %v1707 = vpack.c.b16 %v1706, %v1705
        %v1716 = vunpack.c.l.b16 %v255
        %v1717 = vunpack.c.l.b16 %v256
        %v1718 = vunpack.c.l.b16 %v257
        %v1719 = vunpack.c.l.b16 %v258
        %v1720 = vunpack.c.l.b16 %v259
        %v1721 = vunpack.c.l.b16 %v260
        %v1722 = vunpack.c.l.b16 %v261
        %v1723 = vunpack.c.l.b16 %v262
        %v1724 = vpack.c.b16 %v1717, %v1716
        %v1725 = vpack.c.b16 %v1719, %v1718
        %v1726 = vpack.c.b16 %v1721, %v1720
        %v1727 = vpack.c.b16 %v1723, %v1722
        %v1733 = vsel %vm514, %v1707, 0
        %1735 = vmatprep.subr.bf16.mxu0 0
        %1736 = vmatpush1.bf16.msra.mxu0 0
        %1737 = vmatprep.subr.bf16.mxu0 0
        %1738 = vmatpush1.bf16.msra.mxu0 0
        %1739 = vmatprep.subr.bf16.mxu0 0
        %1740 = vmatpush1.bf16.msra.mxu0 0
        %1741 = vmatprep.subr.bf16.mxu0 0
        %1742 = vmatpush1.bf16.msra.mxu0 0
        %1743 = vmatprep.subr.bf16.mxu0 0
        %1744 = vmatpush1.bf16.msra.mxu0 %v1727
        %1745 = vmatprep.subr.bf16.mxu0 0
        %1746 = vmatpush1.bf16.msra.mxu0 %v1726
        %1747 = vmatprep.subr.bf16.mxu0 0
        %1748 = vmatpush1.bf16.msra.mxu0 %v1725
        %1749 = vmatprep.subr.bf16.mxu0 0
        %1750 = vmatpush1.bf16.msra.mxu0 %v1724
        %1751 = vmatprep.subr.bf16.mxu0 0
        %1752 = vmatpush2.bf16.msra.mxu0 0
        %1753 = vmatprep.subr.bf16.mxu0 0
        %1754 = vmatpush2.bf16.msra.mxu0 0
        %1755 = vmatprep.subr.bf16.mxu0 0
        %1756 = vmatpush2.bf16.msra.mxu0 0
        %1757 = vmatprep.subr.bf16.mxu0 0
        %1758 = vmatpush2.bf16.msra.mxu0 0
        %1759 = vmatprep.subr.bf16.mxu0 0
        %1760 = vmatpush2.bf16.msra.mxu0 0
        %1761 = vmatprep.subr.bf16.mxu0 0
        %1762 = vmatpush2.bf16.msra.mxu0 0
        %1763 = vmatprep.subr.bf16.mxu0 0
        %1764 = vmatpush2.bf16.msra.mxu0 0
        %1765 = vmatprep.subr.bf16.mxu0 0
        %1766 = vmatpush2.bf16.msra.mxu0 0
        %1767 = vmatprep.mubr.bf16.mxu0 0
        %1768 = vmatmul.mubr.bf16.gmra.mxu0 %v522
        %v1769 = vpop.f32.mrf.mxu0
        %v1770 = vadd.f32 0.0, %v1769
        %v1771 = vpop.f32.mrf.mxu0
        %v1772 = vpop.f32.mrf.mxu0
        %v1773 = vadd.f32 0.0, %v1772
        %v1774 = vpop.f32.mrf.mxu0
        %1775 = vmatprep.mubr.bf16.mxu0 0
        %1776 = vmatmul.mubr.bf16.gmra.mxu0 %v525
        %v1777 = vpop.f32.mrf.mxu0
        %v1778 = vadd.f32 0.0, %v1777
        %v1779 = vpop.f32.mrf.mxu0
        %v1780 = vpop.f32.mrf.mxu0
        %v1781 = vadd.f32 0.0, %v1780
        %v1782 = vpop.f32.mrf.mxu0
        %1783 = vmatprep.mubr.bf16.mxu0 0
        %1784 = vmatmul.mubr.bf16.gmra.mxu0 %v528
        %v1785 = vpop.f32.mrf.mxu0
        %v1786 = vadd.f32 0.0, %v1785
        %v1787 = vpop.f32.mrf.mxu0
        %v1788 = vpop.f32.mrf.mxu0
        %v1789 = vadd.f32 0.0, %v1788
        %v1790 = vpop.f32.mrf.mxu0
        %1791 = vmatprep.mubr.bf16.mxu0 0
        %1792 = vmatmul.mubr.bf16.gmra.mxu0 %v531
        %v1793 = vpop.f32.mrf.mxu0
        %v1794 = vadd.f32 0.0, %v1793
        %v1795 = vpop.f32.mrf.mxu0
        %v1796 = vpop.f32.mrf.mxu0
        %v1797 = vadd.f32 0.0, %v1796
        %v1798 = vpop.f32.mrf.mxu0
        %1799 = vmatprep.mubr.bf16.mxu0 0
        %1800 = vmatmul.mubr.bf16.gmra.mxu0 %v534
        %v1801 = vpop.f32.mrf.mxu0
        %v1802 = vadd.f32 0.0, %v1801
        %v1803 = vpop.f32.mrf.mxu0
        %v1804 = vpop.f32.mrf.mxu0
        %v1805 = vadd.f32 0.0, %v1804
        %v1806 = vpop.f32.mrf.mxu0
        %1807 = vmatprep.mubr.bf16.mxu0 0
        %1808 = vmatmul.mubr.bf16.gmra.mxu0 %v537
        %v1809 = vpop.f32.mrf.mxu0
        %v1810 = vadd.f32 0.0, %v1809
        %v1811 = vpop.f32.mrf.mxu0
        %v1812 = vpop.f32.mrf.mxu0
        %v1813 = vadd.f32 0.0, %v1812
        %v1814 = vpop.f32.mrf.mxu0
        %1815 = vmatprep.mubr.bf16.mxu0 0
        %1816 = vmatmul.mubr.bf16.gmra.mxu0 %v1270
        %v1817 = vpop.f32.mrf.mxu0
        %v1818 = vadd.f32 0.0, %v1817
        %v1819 = vpop.f32.mrf.mxu0
        %v1820 = vpop.f32.mrf.mxu0
        %v1821 = vadd.f32 0.0, %v1820
        %v1822 = vpop.f32.mrf.mxu0
        %1823 = vmatprep.mubr.bf16.mxu0 0
        %1824 = vmatmul.mubr.bf16.gmra.mxu0 %v1733
        %v1825 = vpop.f32.mrf.mxu0
        %v1826 = vadd.f32 0.0, %v1825
        %v1827 = vpop.f32.mrf.mxu0
        %v1828 = vpop.f32.mrf.mxu0
        %v1829 = vadd.f32 0.0, %v1828
        %v1830 = vpop.f32.mrf.mxu0
        %1831 = vdwg.mxu0
        %v1832 = vadd.f32 %v1665, %v1770
        %v1833 = vadd.f32 %v1666, %v1773
        %v1834 = vadd.f32 %v1667, %v1778
        %v1835 = vadd.f32 %v1668, %v1781
        %v1836 = vadd.f32 %v1669, %v1786
        %v1837 = vadd.f32 %v1670, %v1789
        %v1838 = vadd.f32 %v1671, %v1794
        %v1839 = vadd.f32 %v1672, %v1797
        %v1840 = vadd.f32 %v1673, %v1802
        %v1841 = vadd.f32 %v1674, %v1805
        %v1842 = vadd.f32 %v1675, %v1810
        %v1843 = vadd.f32 %v1676, %v1813
        %v1844 = vadd.f32 %v1677, %v1818
        %v1845 = vadd.f32 %v1678, %v1821
        %v1846 = vadd.f32 %v1679, %v1826
        %v1847 = vadd.f32 %v1680, %v1829
        %v1849 = vrot.slane %v196, 5
        %v1850 = vrot.slane %v1849, 4
        %v1851 = vrot.slane %v197, 5
        %v1852 = vsel %vm831, %v1850, %v1851
        %v1853 = vrot.slane %v1851, 4
        %v1854 = vrot.slane %v198, 5
        %v1855 = vsel %vm831, %v1853, %v1854
        %v1856 = vunpack.c.l.b16 %v1852
        %v1857 = vunpack.c.l.b16 %v1855
        %v1858 = vpack.c.b16 %v1857, %v1856
        %v1867 = vunpack.c.l.b16 %v263
        %v1868 = vunpack.c.l.b16 %v264
        %v1869 = vunpack.c.l.b16 %v265
        %v1870 = vunpack.c.l.b16 %v266
        %v1871 = vunpack.c.l.b16 %v267
        %v1872 = vunpack.c.l.b16 %v268
        %v1873 = vunpack.c.l.b16 %v269
        %v1874 = vunpack.c.l.b16 %v270
        %v1875 = vpack.c.b16 %v1868, %v1867
        %v1876 = vpack.c.b16 %v1870, %v1869
        %v1877 = vpack.c.b16 %v1872, %v1871
        %v1878 = vpack.c.b16 %v1874, %v1873
        %v1884 = vsel %vm514, %v1858, 0
        %1886 = vmatprep.subr.bf16.mxu0 0
        %1887 = vmatpush1.bf16.msra.mxu0 0
        %1888 = vmatprep.subr.bf16.mxu0 0
        %1889 = vmatpush1.bf16.msra.mxu0 0
        %1890 = vmatprep.subr.bf16.mxu0 0
        %1891 = vmatpush1.bf16.msra.mxu0 0
        %1892 = vmatprep.subr.bf16.mxu0 0
        %1893 = vmatpush1.bf16.msra.mxu0 0
        %1894 = vmatprep.subr.bf16.mxu0 0
        %1895 = vmatpush1.bf16.msra.mxu0 %v1878
        %1896 = vmatprep.subr.bf16.mxu0 0
        %1897 = vmatpush1.bf16.msra.mxu0 %v1877
        %1898 = vmatprep.subr.bf16.mxu0 0
        %1899 = vmatpush1.bf16.msra.mxu0 %v1876
        %1900 = vmatprep.subr.bf16.mxu0 0
        %1901 = vmatpush1.bf16.msra.mxu0 %v1875
        %1902 = vmatprep.subr.bf16.mxu0 0
        %1903 = vmatpush2.bf16.msra.mxu0 0
        %1904 = vmatprep.subr.bf16.mxu0 0
        %1905 = vmatpush2.bf16.msra.mxu0 0
        %1906 = vmatprep.subr.bf16.mxu0 0
        %1907 = vmatpush2.bf16.msra.mxu0 0
        %1908 = vmatprep.subr.bf16.mxu0 0
        %1909 = vmatpush2.bf16.msra.mxu0 0
        %1910 = vmatprep.subr.bf16.mxu0 0
        %1911 = vmatpush2.bf16.msra.mxu0 0
        %1912 = vmatprep.subr.bf16.mxu0 0
        %1913 = vmatpush2.bf16.msra.mxu0 0
        %1914 = vmatprep.subr.bf16.mxu0 0
        %1915 = vmatpush2.bf16.msra.mxu0 0
        %1916 = vmatprep.subr.bf16.mxu0 0
        %1917 = vmatpush2.bf16.msra.mxu0 0
        %1918 = vmatprep.mubr.bf16.mxu0 0
        %1919 = vmatmul.mubr.bf16.gmra.mxu0 %v943
        %v1920 = vpop.f32.mrf.mxu0
        %v1921 = vadd.f32 0.0, %v1920
        %v1922 = vpop.f32.mrf.mxu0
        %v1923 = vpop.f32.mrf.mxu0
        %v1924 = vadd.f32 0.0, %v1923
        %v1925 = vpop.f32.mrf.mxu0
        %1926 = vmatprep.mubr.bf16.mxu0 0
        %1927 = vmatmul.mubr.bf16.gmra.mxu0 %v946
        %v1928 = vpop.f32.mrf.mxu0
        %v1929 = vadd.f32 0.0, %v1928
        %v1930 = vpop.f32.mrf.mxu0
        %v1931 = vpop.f32.mrf.mxu0
        %v1932 = vadd.f32 0.0, %v1931
        %v1933 = vpop.f32.mrf.mxu0
        %1934 = vmatprep.mubr.bf16.mxu0 0
        %1935 = vmatmul.mubr.bf16.gmra.mxu0 %v949
        %v1936 = vpop.f32.mrf.mxu0
        %v1937 = vadd.f32 0.0, %v1936
        %v1938 = vpop.f32.mrf.mxu0
        %v1939 = vpop.f32.mrf.mxu0
        %v1940 = vadd.f32 0.0, %v1939
        %v1941 = vpop.f32.mrf.mxu0
        %1942 = vmatprep.mubr.bf16.mxu0 0
        %1943 = vmatmul.mubr.bf16.gmra.mxu0 %v952
        %v1944 = vpop.f32.mrf.mxu0
        %v1945 = vadd.f32 0.0, %v1944
        %v1946 = vpop.f32.mrf.mxu0
        %v1947 = vpop.f32.mrf.mxu0
        %v1948 = vadd.f32 0.0, %v1947
        %v1949 = vpop.f32.mrf.mxu0
        %1950 = vmatprep.mubr.bf16.mxu0 0
        %1951 = vmatmul.mubr.bf16.gmra.mxu0 %v955
        %v1952 = vpop.f32.mrf.mxu0
        %v1953 = vadd.f32 0.0, %v1952
        %v1954 = vpop.f32.mrf.mxu0
        %v1955 = vpop.f32.mrf.mxu0
        %v1956 = vadd.f32 0.0, %v1955
        %v1957 = vpop.f32.mrf.mxu0
        %1958 = vmatprep.mubr.bf16.mxu0 0
        %1959 = vmatmul.mubr.bf16.gmra.mxu0 %v958
        %v1960 = vpop.f32.mrf.mxu0
        %v1961 = vadd.f32 0.0, %v1960
        %v1962 = vpop.f32.mrf.mxu0
        %v1963 = vpop.f32.mrf.mxu0
        %v1964 = vadd.f32 0.0, %v1963
        %v1965 = vpop.f32.mrf.mxu0
        %1966 = vmatprep.mubr.bf16.mxu0 0
        %1967 = vmatmul.mubr.bf16.gmra.mxu0 %v1421
        %v1968 = vpop.f32.mrf.mxu0
        %v1969 = vadd.f32 0.0, %v1968
        %v1970 = vpop.f32.mrf.mxu0
        %v1971 = vpop.f32.mrf.mxu0
        %v1972 = vadd.f32 0.0, %v1971
        %v1973 = vpop.f32.mrf.mxu0
        %1974 = vmatprep.mubr.bf16.mxu0 0
        %1975 = vmatmul.mubr.bf16.gmra.mxu0 %v1884
        %v1976 = vpop.f32.mrf.mxu0
        %v1977 = vadd.f32 0.0, %v1976
        %v1978 = vpop.f32.mrf.mxu0
        %v1979 = vpop.f32.mrf.mxu0
        %v1980 = vadd.f32 0.0, %v1979
        %v1981 = vpop.f32.mrf.mxu0
        %1982 = vdwg.mxu0
        %v1983 = vadd.f32 %v1832, %v1921
        %v1984 = vadd.f32 %v1833, %v1924
        %v1985 = vadd.f32 %v1834, %v1929
        %v1986 = vadd.f32 %v1835, %v1932
        %v1987 = vadd.f32 %v1836, %v1937
        %v1988 = vadd.f32 %v1837, %v1940
        %v1989 = vadd.f32 %v1838, %v1945
        %v1990 = vadd.f32 %v1839, %v1948
        %v1991 = vadd.f32 %v1840, %v1953
        %v1992 = vadd.f32 %v1841, %v1956
        %v1993 = vadd.f32 %v1842, %v1961
        %v1994 = vadd.f32 %v1843, %v1964
        %v1995 = vadd.f32 %v1844, %v1969
        %v1996 = vadd.f32 %v1845, %v1972
        %v1997 = vadd.f32 %v1846, %v1977
        %v1998 = vadd.f32 %v1847, %v1980
        %v1999 = vsel %vm514, %v1983, 0.0
        %v2000 = vsel %vm514, %v1984, 0.0
        %v2001 = vadd.f32 %v1999, %v2000
        %v2002 = vsel %vm514, %v1985, 0.0
        %v2003 = vadd.f32 %v2001, %v2002
        %v2004 = vsel %vm514, %v1986, 0.0
        %v2005 = vadd.f32 %v2003, %v2004
        %v2006 = vsel %vm514, %v1987, 0.0
        %v2007 = vadd.f32 %v2005, %v2006
        %v2008 = vsel %vm514, %v1988, 0.0
        %v2009 = vadd.f32 %v2007, %v2008
        %v2010 = vsel %vm514, %v1989, 0.0
        %v2011 = vadd.f32 %v2009, %v2010
        %v2012 = vsel %vm514, %v1990, 0.0
        %v2013 = vadd.f32 %v2011, %v2012
        %v2014 = vsel %vm514, %v1991, 0.0
        %v2015 = vadd.f32 %v2013, %v2014
        %v2016 = vsel %vm514, %v1992, 0.0
        %v2017 = vadd.f32 %v2015, %v2016
        %v2018 = vsel %vm514, %v1993, 0.0
        %v2019 = vadd.f32 %v2017, %v2018
        %v2020 = vsel %vm514, %v1994, 0.0
        %v2021 = vadd.f32 %v2019, %v2020
        %v2022 = vsel %vm514, %v1995, 0.0
        %v2023 = vadd.f32 %v2021, %v2022
        %v2024 = vsel %vm514, %v1996, 0.0
        %v2025 = vadd.f32 %v2023, %v2024
        %v2026 = vsel %vm514, %v1997, 0.0
        %v2027 = vadd.f32 %v2025, %v2026
        %v2028 = vsel %vm514, %v1998, 0.0
        %v2029 = vadd.f32 %v2027, %v2028
        %v2030 = vrot.slane %v2029, 4
        %v2031 = vadd.f32 %v2029, %v2030
        %v2032 = vrot.slane %v2031, 2
        %v2033 = vadd.f32 %v2031, %v2032
        %v2034 = vrot.slane %v2033, 1
        %v2035 = vadd.f32 %v2033, %v2034
        %v2036 = vmul.f32 %v1983, %v1983
        %v2037 = vmul.f32 %v1984, %v1984
        %v2038 = vmul.f32 %v1985, %v1985
        %v2039 = vmul.f32 %v1986, %v1986
        %v2040 = vmul.f32 %v1987, %v1987
        %v2041 = vmul.f32 %v1988, %v1988
        %v2042 = vmul.f32 %v1989, %v1989
        %v2043 = vmul.f32 %v1990, %v1990
        %v2044 = vmul.f32 %v1991, %v1991
        %v2045 = vmul.f32 %v1992, %v1992
        %v2046 = vmul.f32 %v1993, %v1993
        %v2047 = vmul.f32 %v1994, %v1994
        %v2048 = vmul.f32 %v1995, %v1995
        %v2049 = vmul.f32 %v1996, %v1996
        %v2050 = vmul.f32 %v1997, %v1997
        %v2051 = vmul.f32 %v1998, %v1998
        %v2052 = vsel %vm514, %v2036, 0.0
        %v2053 = vsel %vm514, %v2037, 0.0
        %v2054 = vadd.f32 %v2052, %v2053
        %v2055 = vsel %vm514, %v2038, 0.0
        %v2056 = vadd.f32 %v2054, %v2055
        %v2057 = vsel %vm514, %v2039, 0.0
        %v2058 = vadd.f32 %v2056, %v2057
        %v2059 = vsel %vm514, %v2040, 0.0
        %v2060 = vadd.f32 %v2058, %v2059
        %v2061 = vsel %vm514, %v2041, 0.0
        %v2062 = vadd.f32 %v2060, %v2061
        %v2063 = vsel %vm514, %v2042, 0.0
        %v2064 = vadd.f32 %v2062, %v2063
        %v2065 = vsel %vm514, %v2043, 0.0
        %v2066 = vadd.f32 %v2064, %v2065
        %v2067 = vsel %vm514, %v2044, 0.0
        %v2068 = vadd.f32 %v2066, %v2067
        %v2069 = vsel %vm514, %v2045, 0.0
        %v2070 = vadd.f32 %v2068, %v2069
        %v2071 = vsel %vm514, %v2046, 0.0
        %v2072 = vadd.f32 %v2070, %v2071
        %v2073 = vsel %vm514, %v2047, 0.0
        %v2074 = vadd.f32 %v2072, %v2073
        %v2075 = vsel %vm514, %v2048, 0.0
        %v2076 = vadd.f32 %v2074, %v2075
        %v2077 = vsel %vm514, %v2049, 0.0
        %v2078 = vadd.f32 %v2076, %v2077
        %v2079 = vsel %vm514, %v2050, 0.0
        %v2080 = vadd.f32 %v2078, %v2079
        %v2081 = vsel %vm514, %v2051, 0.0
        %v2082 = vadd.f32 %v2080, %v2081
        %v2083 = vrot.slane %v2082, 4
        %v2084 = vadd.f32 %v2082, %v2083
        %v2085 = vrot.slane %v2084, 2
        %v2086 = vadd.f32 %v2084, %v2085
        %v2087 = vrot.slane %v2086, 1
        %v2088 = vadd.f32 %v2086, %v2087
        %p2089 = scmp.eq.s32.totalorder %s21, 0
        // Predicated region
        $region29: #{tpu_custom_call.1} parent=27 // pred_check
          %p2090 = pneg %p2089
        $region30: #{tpu_custom_call.1} parent=27 // pred_check_branch
          %2092 = sbr.rel (%p2090) target = $region32
        $region31: #{tpu_custom_call.1} parent=27 // pred_region
          %vm2093 = vcmask 517120
          %2094 = vst.msk [vmem:[%s158] sm:$0x3] %vm2093, 0.0
        $region32: #{tpu_custom_call.1} parent=27 // pred_fallthru
          _
        %v2095 = vld [vmem:[%s158] sm:$0x3]
        %vm2096 = vcmask 1040384
        %v2097 = vsel %vm2096, %v2035, %v2088
        %v2098 = vadd.f32 %v2095, %v2097
        %vm2099 = vcmask 517120
        %2100 = vst.msk [vmem:[%s158] sm:$0x3] %vm2099, %v2098
        %s2101 = sand.u32 %s85, 1
        %s2102 = scalar_lea.sflag [#allocation3], %s2101
        %s2103 = sand.u32 %s85, 1
        %s2104 = smul.addr %s2103, 2
        %s2105 = scalar_lea.vmem [#allocation2], %s2104
        // Predicated region
        $region33: #{tpu_custom_call.1} parent=27 // pred_check
          %p2106 = pneg %p95
        $region34: #{tpu_custom_call.1} parent=27 // pred_check_branch
          %2108 = sbr.rel (%p2106) target = $region36
        $region35: #{tpu_custom_call.1} parent=27 // pred_region
          %s2110 = ssub.s32 32, 32
          %2111 = vsyncadd %s2102, %s2110
          %s2112 = smul.addr %s20, 32
          %s2113 = scalar_lea.hbm %s2, %s2112
          %s2115 = sshll.u32 %s2105, 4
          %s2116 = int_to_ptr.vmem [resolvable:$true] %s2115
          %2118 = dma.vmem_to_hbm [thread:$0]  %s2116, 32, %s2113, %s2102
        $region36: #{tpu_custom_call.1} parent=27 // pred_fallthru
          _
      $region28: #{tpu_custom_call.1} parent=5 // pred_fallthru
        _
      %p2119 = scmp.le.s32.totalorder 2, %s11
      // Predicated region
      $region37: #{tpu_custom_call.1} parent=5 // pred_check
        %p2120 = pneg %p2119
      $region38: #{tpu_custom_call.1} parent=5 // pred_check_branch
        %2122 = sbr.rel (%p2120) target = $region40
      $region39: #{tpu_custom_call.1} parent=5 // pred_region
        %s2123 = ssub.s32 %s11, 2
        // Predicated region
        $region41: #{tpu_custom_call.1} parent=39 // pred_check
          %p2124 = pneg %p101
        $region42: #{tpu_custom_call.1} parent=39 // pred_check_branch
          %2126 = sbr.rel (%p2124) target = $region44
        $region43: #{tpu_custom_call.1} parent=39 // pred_region
          %s2127 = sand.u32 %s86, 1
          %s2128 = scalar_lea.sflag [#allocation3], %s2127
          %s2129 = sand.u32 %s86, 1
          %s2130 = smul.addr %s2129, 2
          %s2131 = scalar_lea.vmem [#allocation2], %s2130
          %2132 = dma.done %s2128, 32
        $region44: #{tpu_custom_call.1} parent=39 // pred_fallthru
          _
      $region40: #{tpu_custom_call.1} parent=5 // pred_fallthru
        _
    $region6: #{tpu_custom_call.1} parent=1 // loop_footer
      %s15 = sadd.s32 1, %s11
    $region7: #{tpu_custom_call.1} parent=1 // loop_footer_branch
      %10 = sbr.rel target = $region3
    $region8: #{tpu_custom_call.1} parent=1 // loop_exit
      _
    %2133 = vsyncpa [#allocation3], 1
    %s2134 = scalar_lea.sflag [#allocation3], 1
    %2135 = vsyncpa %s2134, 1

</llo_original>
